<compile_context>
chip_gen: v7x
topology: tpu7x:2x2x1
jax: 0.10.0
libtpu: 0.0.40
codegen_flags: <defaults>
</compile_context>

<pallas_src>
import jax
import jax.numpy as jnp
from jax import lax
from jax.experimental import pallas as pl
from jax.experimental.pallas import tpu as pltpu


# 48 MiB: plenty of pipelining headroom on v5e/v6e (128 MiB) while staying well inside
# v7x's 64 MiB physical VMEM.
_VMEM_LIMIT = 48 * 1024 * 1024


def lstm_recurrence_kernel(x_ref, wih0_ref, whh0_ref, b0_ref,
                           wih1_ref, whh1_ref, b1_ref, wval_ref, bval_ref,
                           hseq_ref, values_ref):
    """Two-layer LSTM recurrence + value head for one batch tile.

    x_ref:      (TB, T, H)  f32 embedded tokens, batch-major
    w*_ref:     (H, 4H)     bf16 LSTM weights (gate order i, f, g, o); b* f32 (1, 4H)
    wval_ref:   (H, 128)    f32 value-head weight, lane-padded (column 0 real)
    hseq_ref:   (TB, T, H)  bf16 layer-1 hidden states (feeds the output projection)
    values_ref: (TB, 128)   f32 lane-padded value-head output (column 0 real)
    """
    TB, T, H = x_ref.shape
    H4 = 4 * H

    wih0 = wih0_ref[...]
    whh0 = whh0_ref[...]
    wih1 = wih1_ref[...]
    whh1 = whh1_ref[...]
    b0 = b0_ref[...]
    b1 = b1_ref[...]

    # Time chunking: sublane-dense hseq stores + chunk-hoisted input projection, with
    # live ranges bounded by the chunk (outer fori_loop boundary) instead of full unroll.
    chunk = 8
    while T % chunk:
        chunk //= 2
    n_chunks = T // chunk

    def gates(z, c):
        # Sigmoid on the whole lane-dense (TB, 4H) block; tanh only on the g slice.
        a = jax.nn.sigmoid(z)
        g = jnp.tanh(z[:, 2 * H:3 * H])
        c_new = a[:, H:2 * H] * c + a[:, 0:H] * g
        h_new = a[:, 3 * H:4 * H] * jnp.tanh(c_new)
        return h_new, c_new

    def chunk_body(ci, carry):
        h0, c0, h1, c1, hsum = carry
        t0 = pl.multiple_of(ci * chunk, chunk)

        # Hoisted layer-0 input projection for this chunk: one (TB*chunk, H) x (H, 4H)
        # bf16 matmul with f32 accumulation (fills MXU rows instead of tiny per-step M=TB).
        x_chunk = x_ref[:, pl.ds(t0, chunk), :]
        xp = (jnp.dot(x_chunk.reshape(TB * chunk, H).astype(jnp.bfloat16), wih0,
                      preferred_element_type=jnp.float32)
              + b0).reshape(TB, chunk, H4)

        h1_chunk = []
        for s in range(chunk):
            # Layer-1 recurrent matmul first: depends only on h1(t-1), so it can overlap
            # the layer-0 matmul / gate math instead of serializing behind a concat.
            r1 = jnp.dot(h1.astype(jnp.bfloat16), whh1,
                         preferred_element_type=jnp.float32)
            z0 = xp[:, s, :] + jnp.dot(h0.astype(jnp.bfloat16), whh0,
                                       preferred_element_type=jnp.float32)
            h0, c0 = gates(z0, c0)
            z1 = r1 + jnp.dot(h0.astype(jnp.bfloat16), wih1,
                              preferred_element_type=jnp.float32) + b1
            h1, c1 = gates(z1, c1)
            h1_chunk.append(h1)
            hsum = hsum + h1

        # One sublane-dense (TB, chunk, H) bf16 store per chunk (no per-step masked vst).
        hseq_ref[:, pl.ds(t0, chunk), :] = (
            jnp.stack(h1_chunk, axis=1).astype(hseq_ref.dtype))
        return (h0, c0, h1, c1, hsum)

    z = jnp.zeros((TB, H), jnp.float32)
    _, _, _, _, hsum = lax.fori_loop(0, n_chunks, chunk_body, (z, z, z, z, z))

    # Value head on the time-mean of h1 (running sum in the carry -> no re-read of hseq).
    hmean = hsum * (1.0 / T)
    values_ref[...] = (jnp.dot(hmean, wval_ref[...],
                               preferred_element_type=jnp.float32) + bval_ref[...])


def output_proj_kernel(h_ref, w_ref, b_ref, o_ref):
    # (TM, H) x (H, TV) tile: bf16 operands, f32 accumulation, wide lane-dense store.
    o_ref[...] = (jnp.dot(h_ref[...], w_ref[...],
                          preferred_element_type=jnp.float32) + b_ref[...])


@jax.jit
def simple_lm_forward(params, input_ids):
    """Equivalent of SimpleLM.forward(input_ids, return_values=True)."""
    B, T = input_ids.shape
    H = params["embedding"].shape[1]
    V = params["w_out"].shape[1]

    # Embedding gather stays in XLA (glue); batch-major layout end to end (no transposes).
    embedded = params["embedding"][input_ids]                          # (B, T, H) f32

    # Lane-pad the value head (tiny) so its in-kernel store stays 128-lane dense.
    wval_p = jnp.zeros((H, 128), jnp.float32).at[:, 0:1].set(params["w_val"])
    bval_p = jnp.zeros((1, 128), jnp.float32).at[:, 0:1].set(params["b_val"])

    # ---- Kernel 1: recurrence on a batch-parallel grid (both TCs on v7x). ----
    TB = 8 if (B > 8 and B % 8 == 0) else B
    hseq, values_p = pl.pallas_call(
        lstm_recurrence_kernel,
        out_shape=(jax.ShapeDtypeStruct((B, T, H), jnp.bfloat16),
                   jax.ShapeDtypeStruct((B, 128), jnp.float32)),
        grid=(B // TB,),
        in_specs=[pl.BlockSpec((TB, T, H), lambda b: (b, 0, 0)),
                  pl.BlockSpec((H, 4 * H), lambda b: (0, 0)),
                  pl.BlockSpec((H, 4 * H), lambda b: (0, 0)),
                  pl.BlockSpec((1, 4 * H), lambda b: (0, 0)),
                  pl.BlockSpec((H, 4 * H), lambda b: (0, 0)),
                  pl.BlockSpec((H, 4 * H), lambda b: (0, 0)),
                  pl.BlockSpec((1, 4 * H), lambda b: (0, 0)),
                  pl.BlockSpec((H, 128), lambda b: (0, 0)),
                  pl.BlockSpec((1, 128), lambda b: (0, 0))],
        out_specs=(pl.BlockSpec((TB, T, H), lambda b: (b, 0, 0)),
                   pl.BlockSpec((TB, 128), lambda b: (b, 0))),
        compiler_params=pltpu.CompilerParams(
            dimension_semantics=("parallel",),
            vmem_limit_bytes=_VMEM_LIMIT),
    )(embedded,
      params["w_ih0_bf16"], params["w_hh0_bf16"], params["b0"],
      params["w_ih1_bf16"], params["w_hh1_bf16"], params["b1"],
      wval_p, bval_p)
    values = values_p[:, 0:1]                                          # (B, 1)

    # ---- Kernel 2: output projection, 2-D (BT, V) tiling with wide V tiles. ----
    BT = B * T
    TV = min(512, V)            # 512-wide lane-dense tiles; full V if smaller
    TM = min(256, BT)
    hflat = hseq.reshape(BT, H)                                        # bf16, free collapse
    logits_flat = pl.pallas_call(
        output_proj_kernel,
        out_shape=jax.ShapeDtypeStruct((BT, V), jnp.float32),
        grid=(pl.cdiv(BT, TM), pl.cdiv(V, TV)),
        in_specs=[pl.BlockSpec((TM, H), lambda i, j: (i, 0)),
                  pl.BlockSpec((H, TV), lambda i, j: (0, j)),
                  pl.BlockSpec((1, TV), lambda i, j: (0, j))],
        out_specs=pl.BlockSpec((TM, TV), lambda i, j: (i, j)),
        compiler_params=pltpu.CompilerParams(
            dimension_semantics=("parallel", "parallel"),
            vmem_limit_bytes=_VMEM_LIMIT),
    )(hflat, params["w_out_bf16"], params["b_out"])
    logits = logits_flat.reshape(B, T, V)                              # batch-major
    return logits, values


def simple_lm_reference(params, input_ids):
    """Pure-JAX reference of the PyTorch forward (for correctness check)."""
    emb = params["embedding"][input_ids]           # (B, T, H)
    B, T, H = emb.shape

    def layer(x_seq, wih, whh, b):
        def step(carry, xt):
            h, c = carry
            z = xt @ wih + h @ whh + b
            i = jax.nn.sigmoid(z[:, :H]); f = jax.nn.sigmoid(z[:, H:2 * H])
            g = jnp.tanh(z[:, 2 * H:3 * H]); o = jax.nn.sigmoid(z[:, 3 * H:])
            c = f * c + i * g
            h = o * jnp.tanh(c)
            return (h, c), h
        z0 = jnp.zeros((B, H), jnp.float32)
        _, hs = lax.scan(step, (z0, z0), jnp.transpose(x_seq, (1, 0, 2)))
        return jnp.transpose(hs, (1, 0, 2))        # (B, T, H)

    h1 = layer(emb, params["w_ih0"], params["w_hh0"], params["b0"])
    h2 = layer(h1, params["w_ih1"], params["w_hh1"], params["b1"])
    logits = h2 @ params["w_out"] + params["b_out"]
    values = h2.mean(axis=1) @ params["w_val"] + params["b_val"]
    return logits, values


def init_params(key, vocab_size, hidden_size):
    """Deterministic synthetic parameters (shapes match nn.Embedding/nn.LSTM/nn.Linear)."""
    H = hidden_size
    bound = 1.0 / (H ** 0.5)
    keys = jax.random.split(key, 13)
    u = lambda k, shape: jax.random.uniform(k, shape, jnp.float32, -bound, bound)
    params = {
        "embedding": jax.random.normal(keys[0], (vocab_size, H), jnp.float32),
        # LSTM layer 0/1 weights stored transposed (input, 4H); gate order i, f, g, o.
        "w_ih0": u(keys[1], (H, 4 * H)),
        "w_hh0": u(keys[2], (H, 4 * H)),
        "b0": u(keys[3], (1, 4 * H)) + u(keys[4], (1, 4 * H)),     # b_ih + b_hh
        "w_ih1": u(keys[5], (H, 4 * H)),
        "w_hh1": u(keys[6], (H, 4 * H)),
        "b1": u(keys[7], (1, 4 * H)) + u(keys[8], (1, 4 * H)),
        # output Linear(H, vocab) and value_head Linear(H, 1), stored transposed.
        "w_out": u(keys[9], (H, vocab_size)),
        "b_out": u(keys[10], (1, vocab_size)),
        "w_val": u(keys[11], (H, 1)),
        "b_val": u(keys[12], (1, 1)),
    }
    # MXU operands pre-cast to bf16 ONCE at init (not per forward call); f32 masters kept
    # for the pure-JAX reference / any f32 consumer.
    for name in ("w_ih0", "w_hh0", "w_ih1", "w_hh1", "w_out"):
        params[name + "_bf16"] = params[name].astype(jnp.bfloat16)
    return params


if __name__ == "__main__":
    VOCAB, HIDDEN, BATCH, SEQ = 256, 32, 2, 8
    key = jax.random.PRNGKey(0)
    pkey, dkey = jax.random.split(key)
    params = init_params(pkey, VOCAB, HIDDEN)
    input_ids = jax.random.randint(dkey, (BATCH, SEQ), 0, VOCAB, dtype=jnp.int32)

    logits, values = simple_lm_forward(params, input_ids)
    logits, values = jax.block_until_ready((logits, values))

    with jax.default_matmul_precision("highest"):
        ref_logits, ref_values = simple_lm_reference(params, input_ids)

    assert logits.shape == (BATCH, SEQ, VOCAB) and values.shape == (BATCH, 1)
    # All kernel matmuls run with bf16 operands + f32 accumulation; tolerances cover that.
    assert jnp.allclose(logits, ref_logits, atol=3e-2, rtol=3e-2), \
        float(jnp.max(jnp.abs(logits - ref_logits)))
    assert jnp.allclose(values, ref_values, atol=2e-2, rtol=2e-2), \
        float(jnp.max(jnp.abs(values - ref_values)))
    print("KERNEL_OK")
</pallas_src>

<mosaic_0001>
module attributes {stable_mosaic.version = 11 : i64} {
  func.func @output_proj_kernel(%arg0: i32, %arg1: i32, %arg2: memref<16x32xbf16, #tpu.memory_space<vmem>>, %arg3: memref<32x256xbf16, #tpu.memory_space<vmem>>, %arg4: memref<1x256xf32, #tpu.memory_space<vmem>>, %arg5: memref<16x256xf32, #tpu.memory_space<vmem>>) attributes {dimension_semantics = [#tpu.dimension_semantics<parallel>, #tpu.dimension_semantics<parallel>], iteration_bounds = array<i64: 1, 1>, scalar_prefetch = 0 : i64, scratch_operands = 0 : i64, tpu.core_type = #tpu.core_type<tc>, window_params = [{transform_indices = @transform_0, window_bounds = array<i64: 16, 32>}, {transform_indices = @transform_1, window_bounds = array<i64: 32, 256>}, {transform_indices = @transform_2, window_bounds = array<i64: 1, 256>}, {transform_indices = @transform_3, window_bounds = array<i64: 16, 256>}]} {
    %c0 = arith.constant 0 : index
    %c0_0 = arith.constant 0 : index
    %0 = vector.load %arg2[%c0, %c0_0] : memref<16x32xbf16, #tpu.memory_space<vmem>>, vector<16x32xbf16>
    %c0_1 = arith.constant 0 : index
    %c0_2 = arith.constant 0 : index
    %1 = vector.load %arg3[%c0_1, %c0_2] : memref<32x256xbf16, #tpu.memory_space<vmem>>, vector<32x256xbf16>
    %cst = arith.constant dense<0.000000e+00> : vector<16x256xf32>
    %2 = tpu.matmul %0, %1, %cst {dimension_numbers = #tpu.dot_dimension_numbers<[1], [0], [0], [1], [0, 0, 1, 1], [], []>} : vector<16x32xbf16>, vector<32x256xbf16>, vector<16x256xf32> -> vector<16x256xf32>
    %c0_3 = arith.constant 0 : index
    %c0_4 = arith.constant 0 : index
    %3 = vector.load %arg4[%c0_3, %c0_4] : memref<1x256xf32, #tpu.memory_space<vmem>>, vector<1x256xf32>
    %4 = vector.broadcast %3 : vector<1x256xf32> to vector<16x256xf32>
    %5 = arith.addf %2, %4 : vector<16x256xf32>
    %c0_5 = arith.constant 0 : index
    %c0_6 = arith.constant 0 : index
    %6 = vector.load %arg5[%c0_5, %c0_6] : memref<16x256xf32, #tpu.memory_space<vmem>>, vector<16x256xf32>
    tpu.vector_store %arg5[%c0_5, %c0_6], %5 {strides = array<i32>} : memref<16x256xf32, #tpu.memory_space<vmem>>, vector<16x256xf32>,
    return
  }
  func.func @transform_0(%arg0: i32, %arg1: i32) -> (i32, i32) {
    %c0_i32 = arith.constant 0 : i32
    %c0_i32_0 = arith.constant 0 : i32
    return %arg0, %c0_i32 : i32, i32
  }
  func.func @transform_1(%arg0: i32, %arg1: i32) -> (i32, i32) {
    %c0_i32 = arith.constant 0 : i32
    %c0_i32_0 = arith.constant 0 : i32
    return %c0_i32, %arg1 : i32, i32
  }
  func.func @transform_2(%arg0: i32, %arg1: i32) -> (i32, i32) {
    %c0_i32 = arith.constant 0 : i32
    %c0_i32_0 = arith.constant 0 : i32
    return %c0_i32, %arg1 : i32, i32
  }
  func.func @transform_3(%arg0: i32, %arg1: i32) -> (i32, i32) {
    %c0_i32 = arith.constant 0 : i32
    return %arg0, %arg1 : i32, i32
  }
}

module attributes {stable_mosaic.version = 11 : i64} {
  func.func @lstm_recurrence_kernel(%arg0: i32, %arg1: memref<2x8x32xf32, #tpu.memory_space<vmem>>, %arg2: memref<32x128xbf16, #tpu.memory_space<vmem>>, %arg3: memref<32x128xbf16, #tpu.memory_space<vmem>>, %arg4: memref<1x128xf32, #tpu.memory_space<vmem>>, %arg5: memref<32x128xbf16, #tpu.memory_space<vmem>>, %arg6: memref<32x128xbf16, #tpu.memory_space<vmem>>, %arg7: memref<1x128xf32, #tpu.memory_space<vmem>>, %arg8: memref<32x128xf32, #tpu.memory_space<vmem>>, %arg9: memref<1x128xf32, #tpu.memory_space<vmem>>, %arg10: memref<2x8x32xbf16, #tpu.memory_space<vmem>>, %arg11: memref<2x128xf32, #tpu.memory_space<vmem>>) attributes {dimension_semantics = [#tpu.dimension_semantics<parallel>], iteration_bounds = array<i64: 1>, scalar_prefetch = 0 : i64, scratch_operands = 0 : i64, tpu.core_type = #tpu.core_type<tc>, window_params = [{transform_indices = @transform_0, window_bounds = array<i64: 2, 8, 32>}, {pipeline_mode = #tpu.pipeline_mode<synchronous>, transform_indices = @transform_1, window_bounds = array<i64: 32, 128>}, {pipeline_mode = #tpu.pipeline_mode<synchronous>, transform_indices = @transform_2, window_bounds = array<i64: 32, 128>}, {pipeline_mode = #tpu.pipeline_mode<synchronous>, transform_indices = @transform_3, window_bounds = array<i64: 1, 128>}, {pipeline_mode = #tpu.pipeline_mode<synchronous>, transform_indices = @transform_4, window_bounds = array<i64: 32, 128>}, {pipeline_mode = #tpu.pipeline_mode<synchronous>, transform_indices = @transform_5, window_bounds = array<i64: 32, 128>}, {pipeline_mode = #tpu.pipeline_mode<synchronous>, transform_indices = @transform_6, window_bounds = array<i64: 1, 128>}, {pipeline_mode = #tpu.pipeline_mode<synchronous>, transform_indices = @transform_7, window_bounds = array<i64: 32, 128>}, {pipeline_mode = #tpu.pipeline_mode<synchronous>, transform_indices = @transform_8, window_bounds = array<i64: 1, 128>}, {transform_indices = @transform_9, window_bounds = array<i64: 2, 8, 32>}, {transform_indices = @transform_10, window_bounds = array<i64: 2, 128>}]} {
    %c0 = arith.constant 0 : index
    %c0_0 = arith.constant 0 : index
    %0 = vector.load %arg2[%c0, %c0_0] : memref<32x128xbf16, #tpu.memory_space<vmem>>, vector<32x128xbf16>
    %c0_1 = arith.constant 0 : index
    %c0_2 = arith.constant 0 : index
    %1 = vector.load %arg3[%c0_1, %c0_2] : memref<32x128xbf16, #tpu.memory_space<vmem>>, vector<32x128xbf16>
    %c0_3 = arith.constant 0 : index
    %c0_4 = arith.constant 0 : index
    %2 = vector.load %arg5[%c0_3, %c0_4] : memref<32x128xbf16, #tpu.memory_space<vmem>>, vector<32x128xbf16>
    %c0_5 = arith.constant 0 : index
    %c0_6 = arith.constant 0 : index
    %3 = vector.load %arg6[%c0_5, %c0_6] : memref<32x128xbf16, #tpu.memory_space<vmem>>, vector<32x128xbf16>
    %c0_7 = arith.constant 0 : index
    %c0_8 = arith.constant 0 : index
    %4 = vector.load %arg4[%c0_7, %c0_8] : memref<1x128xf32, #tpu.memory_space<vmem>>, vector<1x128xf32>
    %c0_9 = arith.constant 0 : index
    %c0_10 = arith.constant 0 : index
    %5 = vector.load %arg7[%c0_9, %c0_10] : memref<1x128xf32, #tpu.memory_space<vmem>>, vector<1x128xf32>
    %cst = arith.constant 0.000000e+00 : f32
    %6 = vector.broadcast %cst : f32 to vector<2x32xf32>
    %c0_i32 = arith.constant 0 : i32
    %c8_i32 = arith.constant 8 : i32
    %7 = arith.muli %c0_i32, %c8_i32 : i32
    %8 = tpu.assume_multiple %7, 8 : i32
    %c0_11 = arith.constant 0 : index
    %9 = arith.index_cast %8 : i32 to index
    %c0_12 = arith.constant 0 : index
    %10 = vector.load %arg1[%c0_11, %9, %c0_12] : memref<2x8x32xf32, #tpu.memory_space<vmem>>, vector<2x8x32xf32>
    %11 = vector.shape_cast %10 : vector<2x8x32xf32> to vector<16x32xf32>
    %12 = arith.truncf %11 : vector<16x32xf32> to vector<16x32xbf16>
    %cst_13 = arith.constant dense<0.000000e+00> : vector<16x128xf32>
    %13 = tpu.matmul %12, %0, %cst_13 {dimension_numbers = #tpu.dot_dimension_numbers<[1], [0], [0], [1], [0, 0, 1, 1], [], []>} : vector<16x32xbf16>, vector<32x128xbf16>, vector<16x128xf32> -> vector<16x128xf32>
    %14 = vector.broadcast %4 : vector<1x128xf32> to vector<16x128xf32>
    %15 = arith.addf %13, %14 : vector<16x128xf32>
    %16 = vector.shape_cast %15 : vector<16x128xf32> to vector<2x8x128xf32>
    %17 = arith.truncf %6 : vector<2x32xf32> to vector<2x32xbf16>
    %cst_14 = arith.constant dense<0.000000e+00> : vector<2x128xf32>
    %18 = tpu.matmul %17, %3, %cst_14 {dimension_numbers = #tpu.dot_dimension_numbers<[1], [0], [0], [1], [0, 0, 1, 1], [], []>} : vector<2x32xbf16>, vector<32x128xbf16>, vector<2x128xf32> -> vector<2x128xf32>
    %19 = vector.extract_strided_slice %16 {offsets = [0, 0, 0], sizes = [2, 1, 128], strides = [1, 1, 1]} : vector<2x8x128xf32> to vector<2x1x128xf32>
    %20 = vector.shape_cast %19 : vector<2x1x128xf32> to vector<2x128xf32>
    %21 = arith.truncf %6 : vector<2x32xf32> to vector<2x32xbf16>
    %cst_15 = arith.constant dense<0.000000e+00> : vector<2x128xf32>
    %22 = tpu.matmul %21, %1, %cst_15 {dimension_numbers = #tpu.dot_dimension_numbers<[1], [0], [0], [1], [0, 0, 1, 1], [], []>} : vector<2x32xbf16>, vector<32x128xbf16>, vector<2x128xf32> -> vector<2x128xf32>
    %23 = arith.addf %20, %22 : vector<2x128xf32>
    %24 = arith.negf %23 : vector<2x128xf32>
    %25 = math.exp %24 : vector<2x128xf32>
    %cst_16 = arith.constant 1.000000e+00 : f32
    %26 = vector.broadcast %cst_16 : f32 to vector<2x128xf32>
    %27 = arith.addf %26, %25 : vector<2x128xf32>
    %28 = arith.divf %26, %27 : vector<2x128xf32>
    %29 = vector.extract_strided_slice %23 {offsets = [0, 64], sizes = [2, 32], strides = [1, 1]} : vector<2x128xf32> to vector<2x32xf32>
    %30 = math.tanh %29 : vector<2x32xf32>
    %31 = vector.extract_strided_slice %28 {offsets = [0, 32], sizes = [2, 32], strides = [1, 1]} : vector<2x128xf32> to vector<2x32xf32>
    %32 = arith.mulf %31, %6 : vector<2x32xf32>
    %33 = vector.extract_strided_slice %28 {offsets = [0, 0], sizes = [2, 32], strides = [1, 1]} : vector<2x128xf32> to vector<2x32xf32>
    %34 = arith.mulf %33, %30 : vector<2x32xf32>
    %35 = arith.addf %32, %34 : vector<2x32xf32>
    %36 = vector.extract_strided_slice %28 {offsets = [0, 96], sizes = [2, 32], strides = [1, 1]} : vector<2x128xf32> to vector<2x32xf32>
    %37 = math.tanh %35 : vector<2x32xf32>
    %38 = arith.mulf %36, %37 : vector<2x32xf32>
    %39 = arith.truncf %38 : vector<2x32xf32> to vector<2x32xbf16>
    %cst_17 = arith.constant dense<0.000000e+00> : vector<2x128xf32>
    %40 = tpu.matmul %39, %2, %cst_17 {dimension_numbers = #tpu.dot_dimension_numbers<[1], [0], [0], [1], [0, 0, 1, 1], [], []>} : vector<2x32xbf16>, vector<32x128xbf16>, vector<2x128xf32> -> vector<2x128xf32>
    %41 = arith.addf %18, %40 : vector<2x128xf32>
    %42 = vector.broadcast %5 : vector<1x128xf32> to vector<2x128xf32>
    %43 = arith.addf %41, %42 : vector<2x128xf32>
    %44 = arith.negf %43 : vector<2x128xf32>
    %45 = math.exp %44 : vector<2x128xf32>
    %cst_18 = arith.constant 1.000000e+00 : f32
    %46 = vector.broadcast %cst_18 : f32 to vector<2x128xf32>
    %47 = arith.addf %46, %45 : vector<2x128xf32>
    %48 = arith.divf %46, %47 : vector<2x128xf32>
    %49 = vector.extract_strided_slice %43 {offsets = [0, 64], sizes = [2, 32], strides = [1, 1]} : vector<2x128xf32> to vector<2x32xf32>
    %50 = math.tanh %49 : vector<2x32xf32>
    %51 = vector.extract_strided_slice %48 {offsets = [0, 32], sizes = [2, 32], strides = [1, 1]} : vector<2x128xf32> to vector<2x32xf32>
    %52 = arith.mulf %51, %6 : vector<2x32xf32>
    %53 = vector.extract_strided_slice %48 {offsets = [0, 0], sizes = [2, 32], strides = [1, 1]} : vector<2x128xf32> to vector<2x32xf32>
    %54 = arith.mulf %53, %50 : vector<2x32xf32>
    %55 = arith.addf %52, %54 : vector<2x32xf32>
    %56 = vector.extract_strided_slice %48 {offsets = [0, 96], sizes = [2, 32], strides = [1, 1]} : vector<2x128xf32> to vector<2x32xf32>
    %57 = math.tanh %55 : vector<2x32xf32>
    %58 = arith.mulf %56, %57 : vector<2x32xf32>
    %59 = arith.addf %6, %58 : vector<2x32xf32>
    %60 = arith.truncf %58 : vector<2x32xf32> to vector<2x32xbf16>
    %cst_19 = arith.constant dense<0.000000e+00> : vector<2x128xf32>
    %61 = tpu.matmul %60, %3, %cst_19 {dimension_numbers = #tpu.dot_dimension_numbers<[1], [0], [0], [1], [0, 0, 1, 1], [], []>} : vector<2x32xbf16>, vector<32x128xbf16>, vector<2x128xf32> -> vector<2x128xf32>
    %62 = vector.extract_strided_slice %16 {offsets = [0, 1, 0], sizes = [2, 1, 128], strides = [1, 1, 1]} : vector<2x8x128xf32> to vector<2x1x128xf32>
    %63 = vector.shape_cast %62 : vector<2x1x128xf32> to vector<2x128xf32>
    %64 = arith.truncf %38 : vector<2x32xf32> to vector<2x32xbf16>
    %cst_20 = arith.constant dense<0.000000e+00> : vector<2x128xf32>
    %65 = tpu.matmul %64, %1, %cst_20 {dimension_numbers = #tpu.dot_dimension_numbers<[1], [0], [0], [1], [0, 0, 1, 1], [], []>} : vector<2x32xbf16>, vector<32x128xbf16>, vector<2x128xf32> -> vector<2x128xf32>
    %66 = arith.addf %63, %65 : vector<2x128xf32>
    %67 = arith.negf %66 : vector<2x128xf32>
    %68 = math.exp %67 : vector<2x128xf32>
    %cst_21 = arith.constant 1.000000e+00 : f32
    %69 = vector.broadcast %cst_21 : f32 to vector<2x128xf32>
    %70 = arith.addf %69, %68 : vector<2x128xf32>
    %71 = arith.divf %69, %70 : vector<2x128xf32>
    %72 = vector.extract_strided_slice %66 {offsets = [0, 64], sizes = [2, 32], strides = [1, 1]} : vector<2x128xf32> to vector<2x32xf32>
    %73 = math.tanh %72 : vector<2x32xf32>
    %74 = vector.extract_strided_slice %71 {offsets = [0, 32], sizes = [2, 32], strides = [1, 1]} : vector<2x128xf32> to vector<2x32xf32>
    %75 = arith.mulf %74, %35 : vector<2x32xf32>
    %76 = vector.extract_strided_slice %71 {offsets = [0, 0], sizes = [2, 32], strides = [1, 1]} : vector<2x128xf32> to vector<2x32xf32>
    %77 = arith.mulf %76, %73 : vector<2x32xf32>
    %78 = arith.addf %75, %77 : vector<2x32xf32>
    %79 = vector.extract_strided_slice %71 {offsets = [0, 96], sizes = [2, 32], strides = [1, 1]} : vector<2x128xf32> to vector<2x32xf32>
    %80 = math.tanh %78 : vector<2x32xf32>
    %81 = arith.mulf %79, %80 : vector<2x32xf32>
    %82 = arith.truncf %81 : vector<2x32xf32> to vector<2x32xbf16>
    %cst_22 = arith.constant dense<0.000000e+00> : vector<2x128xf32>
    %83 = tpu.matmul %82, %2, %cst_22 {dimension_numbers = #tpu.dot_dimension_numbers<[1], [0], [0], [1], [0, 0, 1, 1], [], []>} : vector<2x32xbf16>, vector<32x128xbf16>, vector<2x128xf32> -> vector<2x128xf32>
    %84 = arith.addf %61, %83 : vector<2x128xf32>
    %85 = vector.broadcast %5 : vector<1x128xf32> to vector<2x128xf32>
    %86 = arith.addf %84, %85 : vector<2x128xf32>
    %87 = arith.negf %86 : vector<2x128xf32>
    %88 = math.exp %87 : vector<2x128xf32>
    %cst_23 = arith.constant 1.000000e+00 : f32
    %89 = vector.broadcast %cst_23 : f32 to vector<2x128xf32>
    %90 = arith.addf %89, %88 : vector<2x128xf32>
    %91 = arith.divf %89, %90 : vector<2x128xf32>
    %92 = vector.extract_strided_slice %86 {offsets = [0, 64], sizes = [2, 32], strides = [1, 1]} : vector<2x128xf32> to vector<2x32xf32>
    %93 = math.tanh %92 : vector<2x32xf32>
    %94 = vector.extract_strided_slice %91 {offsets = [0, 32], sizes = [2, 32], strides = [1, 1]} : vector<2x128xf32> to vector<2x32xf32>
    %95 = arith.mulf %94, %55 : vector<2x32xf32>
    %96 = vector.extract_strided_slice %91 {offsets = [0, 0], sizes = [2, 32], strides = [1, 1]} : vector<2x128xf32> to vector<2x32xf32>
    %97 = arith.mulf %96, %93 : vector<2x32xf32>
    %98 = arith.addf %95, %97 : vector<2x32xf32>
    %99 = vector.extract_strided_slice %91 {offsets = [0, 96], sizes = [2, 32], strides = [1, 1]} : vector<2x128xf32> to vector<2x32xf32>
    %100 = math.tanh %98 : vector<2x32xf32>
    %101 = arith.mulf %99, %100 : vector<2x32xf32>
    %102 = arith.addf %59, %101 : vector<2x32xf32>
    %103 = arith.truncf %101 : vector<2x32xf32> to vector<2x32xbf16>
    %cst_24 = arith.constant dense<0.000000e+00> : vector<2x128xf32>
    %104 = tpu.matmul %103, %3, %cst_24 {dimension_numbers = #tpu.dot_dimension_numbers<[1], [0], [0], [1], [0, 0, 1, 1], [], []>} : vector<2x32xbf16>, vector<32x128xbf16>, vector<2x128xf32> -> vector<2x128xf32>
    %105 = vector.extract_strided_slice %16 {offsets = [0, 2, 0], sizes = [2, 1, 128], strides = [1, 1, 1]} : vector<2x8x128xf32> to vector<2x1x128xf32>
    %106 = vector.shape_cast %105 : vector<2x1x128xf32> to vector<2x128xf32>
    %107 = arith.truncf %81 : vector<2x32xf32> to vector<2x32xbf16>
    %cst_25 = arith.constant dense<0.000000e+00> : vector<2x128xf32>
    %108 = tpu.matmul %107, %1, %cst_25 {dimension_numbers = #tpu.dot_dimension_numbers<[1], [0], [0], [1], [0, 0, 1, 1], [], []>} : vector<2x32xbf16>, vector<32x128xbf16>, vector<2x128xf32> -> vector<2x128xf32>
    %109 = arith.addf %106, %108 : vector<2x128xf32>
    %110 = arith.negf %109 : vector<2x128xf32>
    %111 = math.exp %110 : vector<2x128xf32>
    %cst_26 = arith.constant 1.000000e+00 : f32
    %112 = vector.broadcast %cst_26 : f32 to vector<2x128xf32>
    %113 = arith.addf %112, %111 : vector<2x128xf32>
    %114 = arith.divf %112, %113 : vector<2x128xf32>
    %115 = vector.extract_strided_slice %109 {offsets = [0, 64], sizes = [2, 32], strides = [1, 1]} : vector<2x128xf32> to vector<2x32xf32>
    %116 = math.tanh %115 : vector<2x32xf32>
    %117 = vector.extract_strided_slice %114 {offsets = [0, 32], sizes = [2, 32], strides = [1, 1]} : vector<2x128xf32> to vector<2x32xf32>
    %118 = arith.mulf %117, %78 : vector<2x32xf32>
    %119 = vector.extract_strided_slice %114 {offsets = [0, 0], sizes = [2, 32], strides = [1, 1]} : vector<2x128xf32> to vector<2x32xf32>
    %120 = arith.mulf %119, %116 : vector<2x32xf32>
    %121 = arith.addf %118, %120 : vector<2x32xf32>
    %122 = vector.extract_strided_slice %114 {offsets = [0, 96], sizes = [2, 32], strides = [1, 1]} : vector<2x128xf32> to vector<2x32xf32>
    %123 = math.tanh %121 : vector<2x32xf32>
    %124 = arith.mulf %122, %123 : vector<2x32xf32>
    %125 = arith.truncf %124 : vector<2x32xf32> to vector<2x32xbf16>
    %cst_27 = arith.constant dense<0.000000e+00> : vector<2x128xf32>
    %126 = tpu.matmul %125, %2, %cst_27 {dimension_numbers = #tpu.dot_dimension_numbers<[1], [0], [0], [1], [0, 0, 1, 1], [], []>} : vector<2x32xbf16>, vector<32x128xbf16>, vector<2x128xf32> -> vector<2x128xf32>
    %127 = arith.addf %104, %126 : vector<2x128xf32>
    %128 = vector.broadcast %5 : vector<1x128xf32> to vector<2x128xf32>
    %129 = arith.addf %127, %128 : vector<2x128xf32>
    %130 = arith.negf %129 : vector<2x128xf32>
    %131 = math.exp %130 : vector<2x128xf32>
    %cst_28 = arith.constant 1.000000e+00 : f32
    %132 = vector.broadcast %cst_28 : f32 to vector<2x128xf32>
    %133 = arith.addf %132, %131 : vector<2x128xf32>
    %134 = arith.divf %132, %133 : vector<2x128xf32>
    %135 = vector.extract_strided_slice %129 {offsets = [0, 64], sizes = [2, 32], strides = [1, 1]} : vector<2x128xf32> to vector<2x32xf32>
    %136 = math.tanh %135 : vector<2x32xf32>
    %137 = vector.extract_strided_slice %134 {offsets = [0, 32], sizes = [2, 32], strides = [1, 1]} : vector<2x128xf32> to vector<2x32xf32>
    %138 = arith.mulf %137, %98 : vector<2x32xf32>
    %139 = vector.extract_strided_slice %134 {offsets = [0, 0], sizes = [2, 32], strides = [1, 1]} : vector<2x128xf32> to vector<2x32xf32>
    %140 = arith.mulf %139, %136 : vector<2x32xf32>
    %141 = arith.addf %138, %140 : vector<2x32xf32>
    %142 = vector.extract_strided_slice %134 {offsets = [0, 96], sizes = [2, 32], strides = [1, 1]} : vector<2x128xf32> to vector<2x32xf32>
    %143 = math.tanh %141 : vector<2x32xf32>
    %144 = arith.mulf %142, %143 : vector<2x32xf32>
    %145 = arith.addf %102, %144 : vector<2x32xf32>
    %146 = arith.truncf %144 : vector<2x32xf32> to vector<2x32xbf16>
    %cst_29 = arith.constant dense<0.000000e+00> : vector<2x128xf32>
    %147 = tpu.matmul %146, %3, %cst_29 {dimension_numbers = #tpu.dot_dimension_numbers<[1], [0], [0], [1], [0, 0, 1, 1], [], []>} : vector<2x32xbf16>, vector<32x128xbf16>, vector<2x128xf32> -> vector<2x128xf32>
    %148 = vector.extract_strided_slice %16 {offsets = [0, 3, 0], sizes = [2, 1, 128], strides = [1, 1, 1]} : vector<2x8x128xf32> to vector<2x1x128xf32>
    %149 = vector.shape_cast %148 : vector<2x1x128xf32> to vector<2x128xf32>
    %150 = arith.truncf %124 : vector<2x32xf32> to vector<2x32xbf16>
    %cst_30 = arith.constant dense<0.000000e+00> : vector<2x128xf32>
    %151 = tpu.matmul %150, %1, %cst_30 {dimension_numbers = #tpu.dot_dimension_numbers<[1], [0], [0], [1], [0, 0, 1, 1], [], []>} : vector<2x32xbf16>, vector<32x128xbf16>, vector<2x128xf32> -> vector<2x128xf32>
    %152 = arith.addf %149, %151 : vector<2x128xf32>
    %153 = arith.negf %152 : vector<2x128xf32>
    %154 = math.exp %153 : vector<2x128xf32>
    %cst_31 = arith.constant 1.000000e+00 : f32
    %155 = vector.broadcast %cst_31 : f32 to vector<2x128xf32>
    %156 = arith.addf %155, %154 : vector<2x128xf32>
    %157 = arith.divf %155, %156 : vector<2x128xf32>
    %158 = vector.extract_strided_slice %152 {offsets = [0, 64], sizes = [2, 32], strides = [1, 1]} : vector<2x128xf32> to vector<2x32xf32>
    %159 = math.tanh %158 : vector<2x32xf32>
    %160 = vector.extract_strided_slice %157 {offsets = [0, 32], sizes = [2, 32], strides = [1, 1]} : vector<2x128xf32> to vector<2x32xf32>
    %161 = arith.mulf %160, %121 : vector<2x32xf32>
    %162 = vector.extract_strided_slice %157 {offsets = [0, 0], sizes = [2, 32], strides = [1, 1]} : vector<2x128xf32> to vector<2x32xf32>
    %163 = arith.mulf %162, %159 : vector<2x32xf32>
    %164 = arith.addf %161, %163 : vector<2x32xf32>
    %165 = vector.extract_strided_slice %157 {offsets = [0, 96], sizes = [2, 32], strides = [1, 1]} : vector<2x128xf32> to vector<2x32xf32>
    %166 = math.tanh %164 : vector<2x32xf32>
    %167 = arith.mulf %165, %166 : vector<2x32xf32>
    %168 = arith.truncf %167 : vector<2x32xf32> to vector<2x32xbf16>
    %cst_32 = arith.constant dense<0.000000e+00> : vector<2x128xf32>
    %169 = tpu.matmul %168, %2, %cst_32 {dimension_numbers = #tpu.dot_dimension_numbers<[1], [0], [0], [1], [0, 0, 1, 1], [], []>} : vector<2x32xbf16>, vector<32x128xbf16>, vector<2x128xf32> -> vector<2x128xf32>
    %170 = arith.addf %147, %169 : vector<2x128xf32>
    %171 = vector.broadcast %5 : vector<1x128xf32> to vector<2x128xf32>
    %172 = arith.addf %170, %171 : vector<2x128xf32>
    %173 = arith.negf %172 : vector<2x128xf32>
    %174 = math.exp %173 : vector<2x128xf32>
    %cst_33 = arith.constant 1.000000e+00 : f32
    %175 = vector.broadcast %cst_33 : f32 to vector<2x128xf32>
    %176 = arith.addf %175, %174 : vector<2x128xf32>
    %177 = arith.divf %175, %176 : vector<2x128xf32>
    %178 = vector.extract_strided_slice %172 {offsets = [0, 64], sizes = [2, 32], strides = [1, 1]} : vector<2x128xf32> to vector<2x32xf32>
    %179 = math.tanh %178 : vector<2x32xf32>
    %180 = vector.extract_strided_slice %177 {offsets = [0, 32], sizes = [2, 32], strides = [1, 1]} : vector<2x128xf32> to vector<2x32xf32>
    %181 = arith.mulf %180, %141 : vector<2x32xf32>
    %182 = vector.extract_strided_slice %177 {offsets = [0, 0], sizes = [2, 32], strides = [1, 1]} : vector<2x128xf32> to vector<2x32xf32>
    %183 = arith.mulf %182, %179 : vector<2x32xf32>
    %184 = arith.addf %181, %183 : vector<2x32xf32>
    %185 = vector.extract_strided_slice %177 {offsets = [0, 96], sizes = [2, 32], strides = [1, 1]} : vector<2x128xf32> to vector<2x32xf32>
    %186 = math.tanh %184 : vector<2x32xf32>
    %187 = arith.mulf %185, %186 : vector<2x32xf32>
    %188 = arith.addf %145, %187 : vector<2x32xf32>
    %189 = arith.truncf %187 : vector<2x32xf32> to vector<2x32xbf16>
    %cst_34 = arith.constant dense<0.000000e+00> : vector<2x128xf32>
    %190 = tpu.matmul %189, %3, %cst_34 {dimension_numbers = #tpu.dot_dimension_numbers<[1], [0], [0], [1], [0, 0, 1, 1], [], []>} : vector<2x32xbf16>, vector<32x128xbf16>, vector<2x128xf32> -> vector<2x128xf32>
    %191 = vector.extract_strided_slice %16 {offsets = [0, 4, 0], sizes = [2, 1, 128], strides = [1, 1, 1]} : vector<2x8x128xf32> to vector<2x1x128xf32>
    %192 = vector.shape_cast %191 : vector<2x1x128xf32> to vector<2x128xf32>
    %193 = arith.truncf %167 : vector<2x32xf32> to vector<2x32xbf16>
    %cst_35 = arith.constant dense<0.000000e+00> : vector<2x128xf32>
    %194 = tpu.matmul %193, %1, %cst_35 {dimension_numbers = #tpu.dot_dimension_numbers<[1], [0], [0], [1], [0, 0, 1, 1], [], []>} : vector<2x32xbf16>, vector<32x128xbf16>, vector<2x128xf32> -> vector<2x128xf32>
    %195 = arith.addf %192, %194 : vector<2x128xf32>
    %196 = arith.negf %195 : vector<2x128xf32>
    %197 = math.exp %196 : vector<2x128xf32>
    %cst_36 = arith.constant 1.000000e+00 : f32
    %198 = vector.broadcast %cst_36 : f32 to vector<2x128xf32>
    %199 = arith.addf %198, %197 : vector<2x128xf32>
    %200 = arith.divf %198, %199 : vector<2x128xf32>
    %201 = vector.extract_strided_slice %195 {offsets = [0, 64], sizes = [2, 32], strides = [1, 1]} : vector<2x128xf32> to vector<2x32xf32>
    %202 = math.tanh %201 : vector<2x32xf32>
    %203 = vector.extract_strided_slice %200 {offsets = [0, 32], sizes = [2, 32], strides = [1, 1]} : vector<2x128xf32> to vector<2x32xf32>
    %204 = arith.mulf %203, %164 : vector<2x32xf32>
    %205 = vector.extract_strided_slice %200 {offsets = [0, 0], sizes = [2, 32], strides = [1, 1]} : vector<2x128xf32> to vector<2x32xf32>
    %206 = arith.mulf %205, %202 : vector<2x32xf32>
    %207 = arith.addf %204, %206 : vector<2x32xf32>
    %208 = vector.extract_strided_slice %200 {offsets = [0, 96], sizes = [2, 32], strides = [1, 1]} : vector<2x128xf32> to vector<2x32xf32>
    %209 = math.tanh %207 : vector<2x32xf32>
    %210 = arith.mulf %208, %209 : vector<2x32xf32>
    %211 = arith.truncf %210 : vector<2x32xf32> to vector<2x32xbf16>
    %cst_37 = arith.constant dense<0.000000e+00> : vector<2x128xf32>
    %212 = tpu.matmul %211, %2, %cst_37 {dimension_numbers = #tpu.dot_dimension_numbers<[1], [0], [0], [1], [0, 0, 1, 1], [], []>} : vector<2x32xbf16>, vector<32x128xbf16>, vector<2x128xf32> -> vector<2x128xf32>
    %213 = arith.addf %190, %212 : vector<2x128xf32>
    %214 = vector.broadcast %5 : vector<1x128xf32> to vector<2x128xf32>
    %215 = arith.addf %213, %214 : vector<2x128xf32>
    %216 = arith.negf %215 : vector<2x128xf32>
    %217 = math.exp %216 : vector<2x128xf32>
    %cst_38 = arith.constant 1.000000e+00 : f32
    %218 = vector.broadcast %cst_38 : f32 to vector<2x128xf32>
    %219 = arith.addf %218, %217 : vector<2x128xf32>
    %220 = arith.divf %218, %219 : vector<2x128xf32>
    %221 = vector.extract_strided_slice %215 {offsets = [0, 64], sizes = [2, 32], strides = [1, 1]} : vector<2x128xf32> to vector<2x32xf32>
    %222 = math.tanh %221 : vector<2x32xf32>
    %223 = vector.extract_strided_slice %220 {offsets = [0, 32], sizes = [2, 32], strides = [1, 1]} : vector<2x128xf32> to vector<2x32xf32>
    %224 = arith.mulf %223, %184 : vector<2x32xf32>
    %225 = vector.extract_strided_slice %220 {offsets = [0, 0], sizes = [2, 32], strides = [1, 1]} : vector<2x128xf32> to vector<2x32xf32>
    %226 = arith.mulf %225, %222 : vector<2x32xf32>
    %227 = arith.addf %224, %226 : vector<2x32xf32>
    %228 = vector.extract_strided_slice %220 {offsets = [0, 96], sizes = [2, 32], strides = [1, 1]} : vector<2x128xf32> to vector<2x32xf32>
    %229 = math.tanh %227 : vector<2x32xf32>
    %230 = arith.mulf %228, %229 : vector<2x32xf32>
    %231 = arith.addf %188, %230 : vector<2x32xf32>
    %232 = arith.truncf %230 : vector<2x32xf32> to vector<2x32xbf16>
    %cst_39 = arith.constant dense<0.000000e+00> : vector<2x128xf32>
    %233 = tpu.matmul %232, %3, %cst_39 {dimension_numbers = #tpu.dot_dimension_numbers<[1], [0], [0], [1], [0, 0, 1, 1], [], []>} : vector<2x32xbf16>, vector<32x128xbf16>, vector<2x128xf32> -> vector<2x128xf32>
    %234 = vector.extract_strided_slice %16 {offsets = [0, 5, 0], sizes = [2, 1, 128], strides = [1, 1, 1]} : vector<2x8x128xf32> to vector<2x1x128xf32>
    %235 = vector.shape_cast %234 : vector<2x1x128xf32> to vector<2x128xf32>
    %236 = arith.truncf %210 : vector<2x32xf32> to vector<2x32xbf16>
    %cst_40 = arith.constant dense<0.000000e+00> : vector<2x128xf32>
    %237 = tpu.matmul %236, %1, %cst_40 {dimension_numbers = #tpu.dot_dimension_numbers<[1], [0], [0], [1], [0, 0, 1, 1], [], []>} : vector<2x32xbf16>, vector<32x128xbf16>, vector<2x128xf32> -> vector<2x128xf32>
    %238 = arith.addf %235, %237 : vector<2x128xf32>
    %239 = arith.negf %238 : vector<2x128xf32>
    %240 = math.exp %239 : vector<2x128xf32>
    %cst_41 = arith.constant 1.000000e+00 : f32
    %241 = vector.broadcast %cst_41 : f32 to vector<2x128xf32>
    %242 = arith.addf %241, %240 : vector<2x128xf32>
    %243 = arith.divf %241, %242 : vector<2x128xf32>
    %244 = vector.extract_strided_slice %238 {offsets = [0, 64], sizes = [2, 32], strides = [1, 1]} : vector<2x128xf32> to vector<2x32xf32>
    %245 = math.tanh %244 : vector<2x32xf32>
    %246 = vector.extract_strided_slice %243 {offsets = [0, 32], sizes = [2, 32], strides = [1, 1]} : vector<2x128xf32> to vector<2x32xf32>
    %247 = arith.mulf %246, %207 : vector<2x32xf32>
    %248 = vector.extract_strided_slice %243 {offsets = [0, 0], sizes = [2, 32], strides = [1, 1]} : vector<2x128xf32> to vector<2x32xf32>
    %249 = arith.mulf %248, %245 : vector<2x32xf32>
    %250 = arith.addf %247, %249 : vector<2x32xf32>
    %251 = vector.extract_strided_slice %243 {offsets = [0, 96], sizes = [2, 32], strides = [1, 1]} : vector<2x128xf32> to vector<2x32xf32>
    %252 = math.tanh %250 : vector<2x32xf32>
    %253 = arith.mulf %251, %252 : vector<2x32xf32>
    %254 = arith.truncf %253 : vector<2x32xf32> to vector<2x32xbf16>
    %cst_42 = arith.constant dense<0.000000e+00> : vector<2x128xf32>
    %255 = tpu.matmul %254, %2, %cst_42 {dimension_numbers = #tpu.dot_dimension_numbers<[1], [0], [0], [1], [0, 0, 1, 1], [], []>} : vector<2x32xbf16>, vector<32x128xbf16>, vector<2x128xf32> -> vector<2x128xf32>
    %256 = arith.addf %233, %255 : vector<2x128xf32>
    %257 = vector.broadcast %5 : vector<1x128xf32> to vector<2x128xf32>
    %258 = arith.addf %256, %257 : vector<2x128xf32>
    %259 = arith.negf %258 : vector<2x128xf32>
    %260 = math.exp %259 : vector<2x128xf32>
    %cst_43 = arith.constant 1.000000e+00 : f32
    %261 = vector.broadcast %cst_43 : f32 to vector<2x128xf32>
    %262 = arith.addf %261, %260 : vector<2x128xf32>
    %263 = arith.divf %261, %262 : vector<2x128xf32>
    %264 = vector.extract_strided_slice %258 {offsets = [0, 64], sizes = [2, 32], strides = [1, 1]} : vector<2x128xf32> to vector<2x32xf32>
    %265 = math.tanh %264 : vector<2x32xf32>
    %266 = vector.extract_strided_slice %263 {offsets = [0, 32], sizes = [2, 32], strides = [1, 1]} : vector<2x128xf32> to vector<2x32xf32>
    %267 = arith.mulf %266, %227 : vector<2x32xf32>
    %268 = vector.extract_strided_slice %263 {offsets = [0, 0], sizes = [2, 32], strides = [1, 1]} : vector<2x128xf32> to vector<2x32xf32>
    %269 = arith.mulf %268, %265 : vector<2x32xf32>
    %270 = arith.addf %267, %269 : vector<2x32xf32>
    %271 = vector.extract_strided_slice %263 {offsets = [0, 96], sizes = [2, 32], strides = [1, 1]} : vector<2x128xf32> to vector<2x32xf32>
    %272 = math.tanh %270 : vector<2x32xf32>
    %273 = arith.mulf %271, %272 : vector<2x32xf32>
    %274 = arith.addf %231, %273 : vector<2x32xf32>
    %275 = arith.truncf %273 : vector<2x32xf32> to vector<2x32xbf16>
    %cst_44 = arith.constant dense<0.000000e+00> : vector<2x128xf32>
    %276 = tpu.matmul %275, %3, %cst_44 {dimension_numbers = #tpu.dot_dimension_numbers<[1], [0], [0], [1], [0, 0, 1, 1], [], []>} : vector<2x32xbf16>, vector<32x128xbf16>, vector<2x128xf32> -> vector<2x128xf32>
    %277 = vector.extract_strided_slice %16 {offsets = [0, 6, 0], sizes = [2, 1, 128], strides = [1, 1, 1]} : vector<2x8x128xf32> to vector<2x1x128xf32>
    %278 = vector.shape_cast %277 : vector<2x1x128xf32> to vector<2x128xf32>
    %279 = arith.truncf %253 : vector<2x32xf32> to vector<2x32xbf16>
    %cst_45 = arith.constant dense<0.000000e+00> : vector<2x128xf32>
    %280 = tpu.matmul %279, %1, %cst_45 {dimension_numbers = #tpu.dot_dimension_numbers<[1], [0], [0], [1], [0, 0, 1, 1], [], []>} : vector<2x32xbf16>, vector<32x128xbf16>, vector<2x128xf32> -> vector<2x128xf32>
    %281 = arith.addf %278, %280 : vector<2x128xf32>
    %282 = arith.negf %281 : vector<2x128xf32>
    %283 = math.exp %282 : vector<2x128xf32>
    %cst_46 = arith.constant 1.000000e+00 : f32
    %284 = vector.broadcast %cst_46 : f32 to vector<2x128xf32>
    %285 = arith.addf %284, %283 : vector<2x128xf32>
    %286 = arith.divf %284, %285 : vector<2x128xf32>
    %287 = vector.extract_strided_slice %281 {offsets = [0, 64], sizes = [2, 32], strides = [1, 1]} : vector<2x128xf32> to vector<2x32xf32>
    %288 = math.tanh %287 : vector<2x32xf32>
    %289 = vector.extract_strided_slice %286 {offsets = [0, 32], sizes = [2, 32], strides = [1, 1]} : vector<2x128xf32> to vector<2x32xf32>
    %290 = arith.mulf %289, %250 : vector<2x32xf32>
    %291 = vector.extract_strided_slice %286 {offsets = [0, 0], sizes = [2, 32], strides = [1, 1]} : vector<2x128xf32> to vector<2x32xf32>
    %292 = arith.mulf %291, %288 : vector<2x32xf32>
    %293 = arith.addf %290, %292 : vector<2x32xf32>
    %294 = vector.extract_strided_slice %286 {offsets = [0, 96], sizes = [2, 32], strides = [1, 1]} : vector<2x128xf32> to vector<2x32xf32>
    %295 = math.tanh %293 : vector<2x32xf32>
    %296 = arith.mulf %294, %295 : vector<2x32xf32>
    %297 = arith.truncf %296 : vector<2x32xf32> to vector<2x32xbf16>
    %cst_47 = arith.constant dense<0.000000e+00> : vector<2x128xf32>
    %298 = tpu.matmul %297, %2, %cst_47 {dimension_numbers = #tpu.dot_dimension_numbers<[1], [0], [0], [1], [0, 0, 1, 1], [], []>} : vector<2x32xbf16>, vector<32x128xbf16>, vector<2x128xf32> -> vector<2x128xf32>
    %299 = arith.addf %276, %298 : vector<2x128xf32>
    %300 = vector.broadcast %5 : vector<1x128xf32> to vector<2x128xf32>
    %301 = arith.addf %299, %300 : vector<2x128xf32>
    %302 = arith.negf %301 : vector<2x128xf32>
    %303 = math.exp %302 : vector<2x128xf32>
    %cst_48 = arith.constant 1.000000e+00 : f32
    %304 = vector.broadcast %cst_48 : f32 to vector<2x128xf32>
    %305 = arith.addf %304, %303 : vector<2x128xf32>
    %306 = arith.divf %304, %305 : vector<2x128xf32>
    %307 = vector.extract_strided_slice %301 {offsets = [0, 64], sizes = [2, 32], strides = [1, 1]} : vector<2x128xf32> to vector<2x32xf32>
    %308 = math.tanh %307 : vector<2x32xf32>
    %309 = vector.extract_strided_slice %306 {offsets = [0, 32], sizes = [2, 32], strides = [1, 1]} : vector<2x128xf32> to vector<2x32xf32>
    %310 = arith.mulf %309, %270 : vector<2x32xf32>
    %311 = vector.extract_strided_slice %306 {offsets = [0, 0], sizes = [2, 32], strides = [1, 1]} : vector<2x128xf32> to vector<2x32xf32>
    %312 = arith.mulf %311, %308 : vector<2x32xf32>
    %313 = arith.addf %310, %312 : vector<2x32xf32>
    %314 = vector.extract_strided_slice %306 {offsets = [0, 96], sizes = [2, 32], strides = [1, 1]} : vector<2x128xf32> to vector<2x32xf32>
    %315 = math.tanh %313 : vector<2x32xf32>
    %316 = arith.mulf %314, %315 : vector<2x32xf32>
    %317 = arith.addf %274, %316 : vector<2x32xf32>
    %318 = arith.truncf %316 : vector<2x32xf32> to vector<2x32xbf16>
    %cst_49 = arith.constant dense<0.000000e+00> : vector<2x128xf32>
    %319 = tpu.matmul %318, %3, %cst_49 {dimension_numbers = #tpu.dot_dimension_numbers<[1], [0], [0], [1], [0, 0, 1, 1], [], []>} : vector<2x32xbf16>, vector<32x128xbf16>, vector<2x128xf32> -> vector<2x128xf32>
    %320 = vector.extract_strided_slice %16 {offsets = [0, 7, 0], sizes = [2, 1, 128], strides = [1, 1, 1]} : vector<2x8x128xf32> to vector<2x1x128xf32>
    %321 = vector.shape_cast %320 : vector<2x1x128xf32> to vector<2x128xf32>
    %322 = arith.truncf %296 : vector<2x32xf32> to vector<2x32xbf16>
    %cst_50 = arith.constant dense<0.000000e+00> : vector<2x128xf32>
    %323 = tpu.matmul %322, %1, %cst_50 {dimension_numbers = #tpu.dot_dimension_numbers<[1], [0], [0], [1], [0, 0, 1, 1], [], []>} : vector<2x32xbf16>, vector<32x128xbf16>, vector<2x128xf32> -> vector<2x128xf32>
    %324 = arith.addf %321, %323 : vector<2x128xf32>
    %325 = arith.negf %324 : vector<2x128xf32>
    %326 = math.exp %325 : vector<2x128xf32>
    %cst_51 = arith.constant 1.000000e+00 : f32
    %327 = vector.broadcast %cst_51 : f32 to vector<2x128xf32>
    %328 = arith.addf %327, %326 : vector<2x128xf32>
    %329 = arith.divf %327, %328 : vector<2x128xf32>
    %330 = vector.extract_strided_slice %324 {offsets = [0, 64], sizes = [2, 32], strides = [1, 1]} : vector<2x128xf32> to vector<2x32xf32>
    %331 = math.tanh %330 : vector<2x32xf32>
    %332 = vector.extract_strided_slice %329 {offsets = [0, 32], sizes = [2, 32], strides = [1, 1]} : vector<2x128xf32> to vector<2x32xf32>
    %333 = arith.mulf %332, %293 : vector<2x32xf32>
    %334 = vector.extract_strided_slice %329 {offsets = [0, 0], sizes = [2, 32], strides = [1, 1]} : vector<2x128xf32> to vector<2x32xf32>
    %335 = arith.mulf %334, %331 : vector<2x32xf32>
    %336 = arith.addf %333, %335 : vector<2x32xf32>
    %337 = vector.extract_strided_slice %329 {offsets = [0, 96], sizes = [2, 32], strides = [1, 1]} : vector<2x128xf32> to vector<2x32xf32>
    %338 = math.tanh %336 : vector<2x32xf32>
    %339 = arith.mulf %337, %338 : vector<2x32xf32>
    %340 = arith.truncf %339 : vector<2x32xf32> to vector<2x32xbf16>
    %cst_52 = arith.constant dense<0.000000e+00> : vector<2x128xf32>
    %341 = tpu.matmul %340, %2, %cst_52 {dimension_numbers = #tpu.dot_dimension_numbers<[1], [0], [0], [1], [0, 0, 1, 1], [], []>} : vector<2x32xbf16>, vector<32x128xbf16>, vector<2x128xf32> -> vector<2x128xf32>
    %342 = arith.addf %319, %341 : vector<2x128xf32>
    %343 = vector.broadcast %5 : vector<1x128xf32> to vector<2x128xf32>
    %344 = arith.addf %342, %343 : vector<2x128xf32>
    %345 = arith.negf %344 : vector<2x128xf32>
    %346 = math.exp %345 : vector<2x128xf32>
    %cst_53 = arith.constant 1.000000e+00 : f32
    %347 = vector.broadcast %cst_53 : f32 to vector<2x128xf32>
    %348 = arith.addf %347, %346 : vector<2x128xf32>
    %349 = arith.divf %347, %348 : vector<2x128xf32>
    %350 = vector.extract_strided_slice %344 {offsets = [0, 64], sizes = [2, 32], strides = [1, 1]} : vector<2x128xf32> to vector<2x32xf32>
    %351 = math.tanh %350 : vector<2x32xf32>
    %352 = vector.extract_strided_slice %349 {offsets = [0, 32], sizes = [2, 32], strides = [1, 1]} : vector<2x128xf32> to vector<2x32xf32>
    %353 = arith.mulf %352, %313 : vector<2x32xf32>
    %354 = vector.extract_strided_slice %349 {offsets = [0, 0], sizes = [2, 32], strides = [1, 1]} : vector<2x128xf32> to vector<2x32xf32>
    %355 = arith.mulf %354, %351 : vector<2x32xf32>
    %356 = arith.addf %353, %355 : vector<2x32xf32>
    %357 = vector.extract_strided_slice %349 {offsets = [0, 96], sizes = [2, 32], strides = [1, 1]} : vector<2x128xf32> to vector<2x32xf32>
    %358 = math.tanh %356 : vector<2x32xf32>
    %359 = arith.mulf %357, %358 : vector<2x32xf32>
    %360 = arith.addf %317, %359 : vector<2x32xf32>
    %361 = vector.shape_cast %58 : vector<2x32xf32> to vector<2x1x32xf32>
    %362 = vector.shape_cast %101 : vector<2x32xf32> to vector<2x1x32xf32>
    %363 = vector.shape_cast %144 : vector<2x32xf32> to vector<2x1x32xf32>
    %364 = vector.shape_cast %187 : vector<2x32xf32> to vector<2x1x32xf32>
    %365 = vector.shape_cast %230 : vector<2x32xf32> to vector<2x1x32xf32>
    %366 = vector.shape_cast %273 : vector<2x32xf32> to vector<2x1x32xf32>
    %367 = vector.shape_cast %316 : vector<2x32xf32> to vector<2x1x32xf32>
    %368 = vector.shape_cast %359 : vector<2x32xf32> to vector<2x1x32xf32>
    %369 = tpu.concatenate %361, %362, %363, %364, %365, %366, %367, %368 in 1 : vector<2x1x32xf32>, vector<2x1x32xf32>, vector<2x1x32xf32>, vector<2x1x32xf32>, vector<2x1x32xf32>, vector<2x1x32xf32>, vector<2x1x32xf32>, vector<2x1x32xf32> -> vector<2x8x32xf32>
    %370 = arith.truncf %369 : vector<2x8x32xf32> to vector<2x8x32xbf16>
    %c0_54 = arith.constant 0 : index
    %371 = arith.index_cast %8 : i32 to index
    %c0_55 = arith.constant 0 : index
    %372 = vector.load %arg10[%c0_54, %371, %c0_55] : memref<2x8x32xbf16, #tpu.memory_space<vmem>>, vector<2x8x32xbf16>
    tpu.vector_store %arg10[%c0_54, %371, %c0_55], %370 {strides = array<i32>} : memref<2x8x32xbf16, #tpu.memory_space<vmem>>, vector<2x8x32xbf16>,
    %c1_i32 = arith.constant 1 : i32
    %cst_56 = arith.constant 1.250000e-01 : f32
    %373 = vector.broadcast %cst_56 : f32 to vector<2x32xf32>
    %374 = arith.mulf %360, %373 : vector<2x32xf32>
    %c0_57 = arith.constant 0 : index
    %c0_58 = arith.constant 0 : index
    %375 = vector.load %arg8[%c0_57, %c0_58] : memref<32x128xf32, #tpu.memory_space<vmem>>, vector<32x128xf32>
    %cst_59 = arith.constant dense<0.000000e+00> : vector<2x128xf32>
    %376 = tpu.matmul %374, %375, %cst_59 {dimension_numbers = #tpu.dot_dimension_numbers<[1], [0], [0], [1], [0, 0, 1, 1], [], []>} : vector<2x32xf32>, vector<32x128xf32>, vector<2x128xf32> -> vector<2x128xf32>
    %c0_60 = arith.constant 0 : index
    %c0_61 = arith.constant 0 : index
    %377 = vector.load %arg9[%c0_60, %c0_61] : memref<1x128xf32, #tpu.memory_space<vmem>>, vector<1x128xf32>
    %378 = vector.broadcast %377 : vector<1x128xf32> to vector<2x128xf32>
    %379 = arith.addf %376, %378 : vector<2x128xf32>
    %c0_62 = arith.constant 0 : index
    %c0_63 = arith.constant 0 : index
    %380 = vector.load %arg11[%c0_62, %c0_63] : memref<2x128xf32, #tpu.memory_space<vmem>>, vector<2x128xf32>
    tpu.vector_store %arg11[%c0_62, %c0_63], %379 {strides = array<i32>} : memref<2x128xf32, #tpu.memory_space<vmem>>, vector<2x128xf32>,
    return
  }
  func.func @transform_0(%arg0: i32) -> (i32, i32, i32) {
    %c0_i32 = arith.constant 0 : i32
    %c0_i32_0 = arith.constant 0 : i32
    %c0_i32_1 = arith.constant 0 : i32
    return %arg0, %c0_i32, %c0_i32_0 : i32, i32, i32
  }
  func.func @transform_1(%arg0: i32) -> (i32, i32) {
    %c0_i32 = arith.constant 0 : i32
    %c0_i32_0 = arith.constant 0 : i32
    %c0_i32_1 = arith.constant 0 : i32
    return %c0_i32, %c0_i32_0 : i32, i32
  }
  func.func @transform_2(%arg0: i32) -> (i32, i32) {
    %c0_i32 = arith.constant 0 : i32
    %c0_i32_0 = arith.constant 0 : i32
    %c0_i32_1 = arith.constant 0 : i32
    return %c0_i32, %c0_i32_0 : i32, i32
  }
  func.func @transform_3(%arg0: i32) -> (i32, i32) {
    %c0_i32 = arith.constant 0 : i32
    %c0_i32_0 = arith.constant 0 : i32
    %c0_i32_1 = arith.constant 0 : i32
    return %c0_i32, %c0_i32_0 : i32, i32
  }
  func.func @transform_4(%arg0: i32) -> (i32, i32) {
    %c0_i32 = arith.constant 0 : i32
    %c0_i32_0 = arith.constant 0 : i32
    %c0_i32_1 = arith.constant 0 : i32
    return %c0_i32, %c0_i32_0 : i32, i32
  }
  func.func @transform_5(%arg0: i32) -> (i32, i32) {
    %c0_i32 = arith.constant 0 : i32
    %c0_i32_0 = arith.constant 0 : i32
    %c0_i32_1 = arith.constant 0 : i32
    return %c0_i32, %c0_i32_0 : i32, i32
  }
  func.func @transform_6(%arg0: i32) -> (i32, i32) {
    %c0_i32 = arith.constant 0 : i32
    %c0_i32_0 = arith.constant 0 : i32
    %c0_i32_1 = arith.constant 0 : i32
    return %c0_i32, %c0_i32_0 : i32, i32
  }
  func.func @transform_7(%arg0: i32) -> (i32, i32) {
    %c0_i32 = arith.constant 0 : i32
    %c0_i32_0 = arith.constant 0 : i32
    %c0_i32_1 = arith.constant 0 : i32
    return %c0_i32, %c0_i32_0 : i32, i32
  }
  func.func @transform_8(%arg0: i32) -> (i32, i32) {
    %c0_i32 = arith.constant 0 : i32
    %c0_i32_0 = arith.constant 0 : i32
    %c0_i32_1 = arith.constant 0 : i32
    return %c0_i32, %c0_i32_0 : i32, i32
  }
  func.func @transform_9(%arg0: i32) -> (i32, i32, i32) {
    %c0_i32 = arith.constant 0 : i32
    %c0_i32_0 = arith.constant 0 : i32
    %c0_i32_1 = arith.constant 0 : i32
    return %arg0, %c0_i32, %c0_i32_0 : i32, i32, i32
  }
  func.func @transform_10(%arg0: i32) -> (i32, i32) {
    %c0_i32 = arith.constant 0 : i32
    %c0_i32_0 = arith.constant 0 : i32
    return %arg0, %c0_i32 : i32, i32
  }
}

</mosaic_0001>

<llo_original>
// kernel: simple_lm_forward.3
$region0: #{simple_lm_forward.3}
  #allocation0 [shape = 'u32[]', space=smem, size = 0x4, offset = 0x4, fixed_abs, tag = 'smem constant byte address 0x4 - core index']
  #allocation1 [shape = 'u32[144,128]{1,0:T(1,128)}', space=vmem, size = 0x12000, scoped, tag = 'internal scratch']
  %s0 = inlined_call_operand.vmem [shape: bf16[16,32], index: 0, kind: input, shape index: {}]
  %s1 = inlined_call_operand.vmem [shape: bf16[32,256], index: 1, kind: input, shape index: {}]
  %s2 = inlined_call_operand.vmem [shape: f32[1,256], index: 2, kind: input, shape index: {}]
  %s3 = inlined_call_operand.hbm [shape: f32[16,256], index: 3, kind: output, shape index: {}]
  %s4 = sld [smem:[#allocation0]]
  $region22: #{simple_lm_forward.3} parent=0
    _
  %s6 = ssub.s32 1, %s4
  %s7 = scalar_select 0, %s6, %s4
  $region1: #{simple_lm_forward.3} parent=0
    #allocation2 [shape = 'u8[16384]{0}', space=vmem, size = 0x4000, scoped, tag = 'output window, operand 0, single buffered']
    #allocation3 [shape = 's32[1]{0}', space=sflag, size = 0x4, scoped, tag = 'scoped memory for simple_lm_forward.3']
    %8 = vsyncpa [#allocation3], 0
    // Predicated region
    $region2: #{simple_lm_forward.3} parent=1 // pred_check
      _
    $region3: #{simple_lm_forward.3} parent=1 // pred_check_branch
      %10 = sbr.rel (0) target = $region5
    $region4: #{simple_lm_forward.3} parent=1 // pred_region
      _
    $region5: #{simple_lm_forward.3} parent=1 // pred_fallthru
      _
    // Predicated region
    $region6: #{simple_lm_forward.3} parent=1 // pred_check
      _
    $region7: #{simple_lm_forward.3} parent=1 // pred_check_branch
      %12 = sbr.rel (0) target = $region9
    $region8: #{simple_lm_forward.3} parent=1 // pred_region
      _
    $region9: #{simple_lm_forward.3} parent=1 // pred_fallthru
      _
    // Predicated region
    $region10: #{simple_lm_forward.3} parent=1 // pred_check
      _
    $region11: #{simple_lm_forward.3} parent=1 // pred_check_branch
      %14 = sbr.rel (0) target = $region13
    $region12: #{simple_lm_forward.3} parent=1 // pred_region
      _
    $region13: #{simple_lm_forward.3} parent=1 // pred_fallthru
      _
    %v16 = vld [vmem:[%s0] sm:$0xf]
    %v17 = vld [vmem:[%s0 + $0x4] sm:$0xf]
    %v18 = vld [vmem:[%s1] sm:$0xff]
    %v19 = vld [vmem:[%s1 + $0x8] sm:$0xff]
    %v20 = vld [vmem:[%s1 + $0x10] sm:$0xff]
    %v21 = vld [vmem:[%s1 + $0x18] sm:$0xff]
    %v22 = vld [vmem:[%s2] sm:$0x3]
    %v24 = vlaneseq
    %v25 = vshrl.u32 %v24, 7
    %v26 = vsub.s32 0, %v25
    %v27 = vrot.slane %v22, %v26
    %v28 = vlaneseq
    %v29 = vshrl.u32 %v28, 7
    %v30 = vsub.s32 1, %v29
    %v31 = vrot.slane %v22, %v30
    %v36 = vunpack.c.l.b16 %v16
    %v37 = vunpack.c.l.b16 %v17
    %v38 = vpack.c.b16 %v37, %v36
    %v43 = vunpack.c.l.b16 %v18
    %v44 = vunpack.c.h.b16 %v18
    %v45 = vunpack.c.l.b16 %v19
    %v46 = vunpack.c.h.b16 %v19
    %v47 = vunpack.c.l.b16 %v20
    %v48 = vunpack.c.h.b16 %v20
    %v49 = vunpack.c.l.b16 %v21
    %v50 = vunpack.c.h.b16 %v21
    %v51 = vpack.c.b16 %v45, %v43
    %v52 = vpack.c.b16 %v46, %v44
    %v53 = vpack.c.b16 %v49, %v47
    %v54 = vpack.c.b16 %v50, %v48
    %vm59 = vcmask 261120
    %v61 = vsel %vm59, %v38, 0
    %63 = vmatprep.subr.bf16.mxu0 %v52
    %64 = vmatpush1.bf16.msra.mxu0 %v51
    %65 = vmatprep.subr.bf16.mxu0 %v54
    %66 = vmatpush1.bf16.msra.mxu0 %v53
    %67 = vmatprep.subr.bf16.mxu0 0
    %68 = vmatpush1.bf16.msra.mxu0 0
    %69 = vmatprep.subr.bf16.mxu0 0
    %70 = vmatpush1.bf16.msra.mxu0 0
    %71 = vmatprep.subr.bf16.mxu0 0
    %72 = vmatpush1.bf16.msra.mxu0 0
    %73 = vmatprep.subr.bf16.mxu0 0
    %74 = vmatpush1.bf16.msra.mxu0 0
    %75 = vmatprep.subr.bf16.mxu0 0
    %76 = vmatpush1.bf16.msra.mxu0 0
    %77 = vmatprep.subr.bf16.mxu0 0
    %78 = vmatpush1.bf16.msra.mxu0 0
    %79 = vmatprep.subr.bf16.mxu0 0
    %80 = vmatpush1.bf16.msra.mxu0 0
    %81 = vmatprep.subr.bf16.mxu0 0
    %82 = vmatpush1.bf16.msra.mxu0 0
    %83 = vmatprep.subr.bf16.mxu0 0
    %84 = vmatpush1.bf16.msra.mxu0 0
    %85 = vmatprep.subr.bf16.mxu0 0
    %86 = vmatpush1.bf16.msra.mxu0 0
    %87 = vmatprep.subr.bf16.mxu0 0
    %88 = vmatpush1.bf16.msra.mxu0 0
    %89 = vmatprep.subr.bf16.mxu0 0
    %90 = vmatpush1.bf16.msra.mxu0 0
    %91 = vmatprep.subr.bf16.mxu0 0
    %92 = vmatpush1.bf16.msra.mxu0 0
    %93 = vmatprep.subr.bf16.mxu0 0
    %94 = vmatpush1.bf16.msra.mxu0 0
    %95 = vmatprep.mubr.bf16.mxu0 0
    %96 = vmatmul.mubr.bf16.gmra.mrb[0].mxu0 %v61
    %v97 = vpop.f32.mrb[0].mxu0
    %v98 = vadd.f32 %v27, %v97
    %v99 = vpop.f32.mrb[0].mxu0
    %v100 = vadd.f32 %v31, %v99
    %v101 = vpop.f32.mrb[0].mxu0
    %v102 = vadd.f32 %v27, %v101
    %v103 = vpop.f32.mrb[0].mxu0
    %v104 = vadd.f32 %v31, %v103
    %105 = vdwg.mxu0
    %106 = vst [vmem:[#allocation2] sm:$0xff] %v98
    %107 = vst [vmem:[#allocation2 + $0x8] sm:$0xff] %v100
    %108 = vst [vmem:[#allocation2 + $0x10] sm:$0xff] %v102
    %109 = vst [vmem:[#allocation2 + $0x18] sm:$0xff] %v104
    // Predicated region
    $region14: #{simple_lm_forward.3} parent=1 // pred_check
      _
    $region15: #{simple_lm_forward.3} parent=1 // pred_check_branch
      %111 = sbr.rel (0) target = $region17
    $region16: #{simple_lm_forward.3} parent=1 // pred_region
      %s113 = ssub.s32 512, 512
      %114 = vsyncadd [#allocation3], %s113
      %s115 = sshll.u32 [#allocation2], 4
      %s116 = int_to_ptr.vmem [resolvable:$true] %s115
      %121 = dma.vmem_to_hbm [thread:$0]  %s116, 512, %s3, [#allocation3], 256, 256, 16
    $region17: #{simple_lm_forward.3} parent=1 // pred_fallthru
      _
    // Predicated region
    $region18: #{simple_lm_forward.3} parent=1 // pred_check
      _
    $region19: #{simple_lm_forward.3} parent=1 // pred_check_branch
      %123 = sbr.rel (0) target = $region21
    $region20: #{simple_lm_forward.3} parent=1 // pred_region
      %124 = dma.done [#allocation3], 512
    $region21: #{simple_lm_forward.3} parent=1 // pred_fallthru
      _
    %125 = vsyncpa [#allocation3], 1

// kernel: simple_lm_forward.2
$region0: #{simple_lm_forward.2}
  #allocation0 [shape = 'u32[]', space=smem, size = 0x4, offset = 0x4, fixed_abs, tag = 'smem constant byte address 0x4 - core index']
  #allocation1 [shape = 'u32[144,128]{1,0:T(1,128)}', space=vmem, size = 0x12000, scoped, tag = 'internal scratch']
  %s0 = inlined_call_operand.vmem [shape: f32[2,8,32], index: 0, kind: input, shape index: {}]
  %s1 = inlined_call_operand.vmem [shape: bf16[32,128], index: 1, kind: input, shape index: {}]
  %s2 = inlined_call_operand.vmem [shape: bf16[32,128], index: 2, kind: input, shape index: {}]
  %s3 = inlined_call_operand.vmem [shape: f32[1,128], index: 3, kind: input, shape index: {}]
  %s4 = inlined_call_operand.vmem [shape: bf16[32,128], index: 4, kind: input, shape index: {}]
  %s5 = inlined_call_operand.vmem [shape: bf16[32,128], index: 5, kind: input, shape index: {}]
  %s6 = inlined_call_operand.vmem [shape: f32[1,128], index: 6, kind: input, shape index: {}]
  %s7 = inlined_call_operand.vmem [shape: f32[32,128], index: 7, kind: input, shape index: {}]
  %s8 = inlined_call_operand.vmem [shape: f32[1,128], index: 8, kind: input, shape index: {}]
  %s9 = inlined_call_operand.vmem [shape: bf16[2,8,32], index: 9, kind: output, shape index: {0}]
  %s10 = inlined_call_operand.vmem [shape: f32[2,128], index: 10, kind: output, shape index: {1}]
  %11 = xla_tuple %s9, %s10
  %s12 = sld [smem:[#allocation0]]
  $region54: #{simple_lm_forward.2} parent=0
    _
  %s14 = ssub.s32 1, %s12
  %s15 = scalar_select 0, %s14, %s12
  // Predicated region
  $region2: #{simple_lm_forward.2} parent=0 // pred_check
    _
  $region3: #{simple_lm_forward.2} parent=0 // pred_check_branch
    %17 = sbr.rel (0) target = $region5
  $region4: #{simple_lm_forward.2} parent=0 // pred_region
    _
  $region5: #{simple_lm_forward.2} parent=0 // pred_fallthru
    _
  // Predicated region
  $region6: #{simple_lm_forward.2} parent=0 // pred_check
    _
  $region7: #{simple_lm_forward.2} parent=0 // pred_check_branch
    %19 = sbr.rel (0) target = $region9
  $region8: #{simple_lm_forward.2} parent=0 // pred_region
    _
  $region9: #{simple_lm_forward.2} parent=0 // pred_fallthru
    _
  // Predicated region
  $region10: #{simple_lm_forward.2} parent=0 // pred_check
    _
  $region11: #{simple_lm_forward.2} parent=0 // pred_check_branch
    %21 = sbr.rel (0) target = $region13
  $region12: #{simple_lm_forward.2} parent=0 // pred_region
    _
  $region13: #{simple_lm_forward.2} parent=0 // pred_fallthru
    _
  // Predicated region
  $region14: #{simple_lm_forward.2} parent=0 // pred_check
    _
  $region15: #{simple_lm_forward.2} parent=0 // pred_check_branch
    %23 = sbr.rel (0) target = $region17
  $region16: #{simple_lm_forward.2} parent=0 // pred_region
    _
  $region17: #{simple_lm_forward.2} parent=0 // pred_fallthru
    _
  // Predicated region
  $region18: #{simple_lm_forward.2} parent=0 // pred_check
    _
  $region19: #{simple_lm_forward.2} parent=0 // pred_check_branch
    %25 = sbr.rel (0) target = $region21
  $region20: #{simple_lm_forward.2} parent=0 // pred_region
    _
  $region21: #{simple_lm_forward.2} parent=0 // pred_fallthru
    _
  // Predicated region
  $region22: #{simple_lm_forward.2} parent=0 // pred_check
    _
  $region23: #{simple_lm_forward.2} parent=0 // pred_check_branch
    %27 = sbr.rel (0) target = $region25
  $region24: #{simple_lm_forward.2} parent=0 // pred_region
    _
  $region25: #{simple_lm_forward.2} parent=0 // pred_fallthru
    _
  // Predicated region
  $region26: #{simple_lm_forward.2} parent=0 // pred_check
    _
  $region27: #{simple_lm_forward.2} parent=0 // pred_check_branch
    %29 = sbr.rel (0) target = $region29
  $region28: #{simple_lm_forward.2} parent=0 // pred_region
    _
  $region29: #{simple_lm_forward.2} parent=0 // pred_fallthru
    _
  // Predicated region
  $region30: #{simple_lm_forward.2} parent=0 // pred_check
    _
  $region31: #{simple_lm_forward.2} parent=0 // pred_check_branch
    %31 = sbr.rel (0) target = $region33
  $region32: #{simple_lm_forward.2} parent=0 // pred_region
    _
  $region33: #{simple_lm_forward.2} parent=0 // pred_fallthru
    _
  // Predicated region
  $region34: #{simple_lm_forward.2} parent=0 // pred_check
    _
  $region35: #{simple_lm_forward.2} parent=0 // pred_check_branch
    %33 = sbr.rel (0) target = $region37
  $region36: #{simple_lm_forward.2} parent=0 // pred_region
    _
  $region37: #{simple_lm_forward.2} parent=0 // pred_fallthru
    _
  %v35 = vld [vmem:[%s1] sm:$0xf]
  %v36 = vld [vmem:[%s1 + $0x4] sm:$0xf]
  %v37 = vld [vmem:[%s1 + $0x8] sm:$0xf]
  %v38 = vld [vmem:[%s1 + $0xc] sm:$0xf]
  %v39 = vld [vmem:[%s2] sm:$0xf]
  %v40 = vld [vmem:[%s2 + $0x4] sm:$0xf]
  %v41 = vld [vmem:[%s2 + $0x8] sm:$0xf]
  %v42 = vld [vmem:[%s2 + $0xc] sm:$0xf]
  %v43 = vld [vmem:[%s4] sm:$0xf]
  %v44 = vld [vmem:[%s4 + $0x4] sm:$0xf]
  %v45 = vld [vmem:[%s4 + $0x8] sm:$0xf]
  %v46 = vld [vmem:[%s4 + $0xc] sm:$0xf]
  %v47 = vld [vmem:[%s5] sm:$0xf]
  %v48 = vld [vmem:[%s5 + $0x4] sm:$0xf]
  %v49 = vld [vmem:[%s5 + $0x8] sm:$0xf]
  %v50 = vld [vmem:[%s5 + $0xc] sm:$0xf]
  %v51 = vld [vmem:[%s3] sm:$0x1]
  %v52 = vld [vmem:[%s6] sm:$0x1]
  %v53 = vld [vmem:[%s0] sm:$0xff]
  %v54 = vld [vmem:[%s0 + $0x8] sm:$0xff]
  %v55 = vpack.c.bf16 %v54, %v53
  %v57 = vlaneseq
  %v58 = vshrl.u32 %v57, 7
  %v59 = vsub.s32 0, %v58
  %v60 = vrot.slane %v51, %v59
  %v66 = vunpack.c.l.b16 %v35
  %v67 = vunpack.c.l.b16 %v36
  %v68 = vunpack.c.l.b16 %v37
  %v69 = vunpack.c.l.b16 %v38
  %v70 = vpack.c.b16 %v67, %v66
  %v71 = vpack.c.b16 %v69, %v68
  %vm74 = vcmask 261120
  %v76 = vsel %vm74, %v55, 0
  %78 = vmatprep.subr.bf16.mxu0 0
  %79 = vmatpush1.bf16.msra.mxu0 %v70
  %80 = vmatprep.subr.bf16.mxu0 0
  %81 = vmatpush1.bf16.msra.mxu0 %v71
  %82 = vmatprep.subr.bf16.mxu0 0
  %83 = vmatpush1.bf16.msra.mxu0 0
  %84 = vmatprep.subr.bf16.mxu0 0
  %85 = vmatpush1.bf16.msra.mxu0 0
  %86 = vmatprep.subr.bf16.mxu0 0
  %87 = vmatpush1.bf16.msra.mxu0 0
  %88 = vmatprep.subr.bf16.mxu0 0
  %89 = vmatpush1.bf16.msra.mxu0 0
  %90 = vmatprep.subr.bf16.mxu0 0
  %91 = vmatpush1.bf16.msra.mxu0 0
  %92 = vmatprep.subr.bf16.mxu0 0
  %93 = vmatpush1.bf16.msra.mxu0 0
  %94 = vmatprep.subr.bf16.mxu0 0
  %95 = vmatpush1.bf16.msra.mxu0 0
  %96 = vmatprep.subr.bf16.mxu0 0
  %97 = vmatpush1.bf16.msra.mxu0 0
  %98 = vmatprep.subr.bf16.mxu0 0
  %99 = vmatpush1.bf16.msra.mxu0 0
  %100 = vmatprep.subr.bf16.mxu0 0
  %101 = vmatpush1.bf16.msra.mxu0 0
  %102 = vmatprep.subr.bf16.mxu0 0
  %103 = vmatpush1.bf16.msra.mxu0 0
  %104 = vmatprep.subr.bf16.mxu0 0
  %105 = vmatpush1.bf16.msra.mxu0 0
  %106 = vmatprep.subr.bf16.mxu0 0
  %107 = vmatpush1.bf16.msra.mxu0 0
  %108 = vmatprep.subr.bf16.mxu0 0
  %109 = vmatpush1.bf16.msra.mxu0 0
  %110 = vmatprep.mubr.bf16.mxu0 0
  %111 = vmatmul.mubr.bf16.gmra.mrb[0].mxu0 %v76
  %v112 = vpop.f32.mrb[0].mxu0
  %v113 = vadd.f32 %v60, %v112
  %v114 = vpop.f32.mrb[0].mxu0
  %v115 = vpop.f32.mrb[0].mxu0
  %v116 = vadd.f32 %v60, %v115
  %v117 = vpop.f32.mrb[0].mxu0
  %118 = vdwg.mxu0
  %v123 = vunpack.c.l.b16 %v39
  %v124 = vunpack.c.l.b16 %v40
  %v125 = vunpack.c.l.b16 %v41
  %v126 = vunpack.c.l.b16 %v42
  %v127 = vpack.c.b16 %v124, %v123
  %v128 = vpack.c.b16 %v126, %v125
  %v132 = vsel %vm74, 0, 0
  %134 = vmatprep.subr.bf16.mxu0 0
  %135 = vmatpush1.bf16.msra.mxu0 %v127
  %136 = vmatprep.subr.bf16.mxu0 0
  %137 = vmatpush1.bf16.msra.mxu0 %v128
  %138 = vmatprep.subr.bf16.mxu0 0
  %139 = vmatpush1.bf16.msra.mxu0 0
  %140 = vmatprep.subr.bf16.mxu0 0
  %141 = vmatpush1.bf16.msra.mxu0 0
  %142 = vmatprep.subr.bf16.mxu0 0
  %143 = vmatpush1.bf16.msra.mxu0 0
  %144 = vmatprep.subr.bf16.mxu0 0
  %145 = vmatpush1.bf16.msra.mxu0 0
  %146 = vmatprep.subr.bf16.mxu0 0
  %147 = vmatpush1.bf16.msra.mxu0 0
  %148 = vmatprep.subr.bf16.mxu0 0
  %149 = vmatpush1.bf16.msra.mxu0 0
  %150 = vmatprep.subr.bf16.mxu0 0
  %151 = vmatpush1.bf16.msra.mxu0 0
  %152 = vmatprep.subr.bf16.mxu0 0
  %153 = vmatpush1.bf16.msra.mxu0 0
  %154 = vmatprep.subr.bf16.mxu0 0
  %155 = vmatpush1.bf16.msra.mxu0 0
  %156 = vmatprep.subr.bf16.mxu0 0
  %157 = vmatpush1.bf16.msra.mxu0 0
  %158 = vmatprep.subr.bf16.mxu0 0
  %159 = vmatpush1.bf16.msra.mxu0 0
  %160 = vmatprep.subr.bf16.mxu0 0
  %161 = vmatpush1.bf16.msra.mxu0 0
  %162 = vmatprep.subr.bf16.mxu0 0
  %163 = vmatpush1.bf16.msra.mxu0 0
  %164 = vmatprep.subr.bf16.mxu0 0
  %165 = vmatpush1.bf16.msra.mxu0 0
  %166 = vmatprep.mubr.bf16.mxu0 0
  %167 = vmatmul.mubr.bf16.gmra.mrb[0].mxu0 %v132
  %v168 = vpop.f32.mrb[0].mxu0
  %v169 = vadd.f32 0.0, %v168
  %v170 = vpop.f32.mrb[0].mxu0
  %v171 = vpop.f32.mrb[0].mxu0
  %v172 = vpop.f32.mrb[0].mxu0
  %173 = vdwg.mxu0
  %v175 = vrot.slane %v169, 1
  %v178 = vadd.f32 %v113, %v169
  %v179 = vadd.f32 %v116, %v175
  %v180 = vxor.u32 %v178, 2147483648
  %v181 = vxor.u32 %v179, 2147483648
  %v182 = vmul.f32 %v180, 1.442695
  %v183 = vpow.pop %v182
  %v184 = vmul.f32 %v181, 1.442695
  %v185 = vpow.pop %v184
  %v186 = vadd.f32 %v183, 1.0
  %v187 = vadd.f32 %v185, 1.0
  %v188 = vrcp.pop %v186
  %v189 = vmul.f32 1.0, %v188
  %v190 = vrcp.pop %v187
  %v191 = vmul.f32 1.0, %v190
  %v192 = vtanh.pop %v178
  %v193 = vtanh.pop %v179
  %v194 = vmul.f32 %v189, 0.0
  %v195 = vmul.f32 %v191, 0.0
  %198 = vrot.lane.b32.xlu0 %v192, 64
  %v199 = vpop.permute.xlu0 %198
  %200 = vrot.lane.b32.xlu0 %v193, 64
  %v201 = vpop.permute.xlu0 %200
  %v204 = vmul.f32 %v189, %v199
  %v205 = vmul.f32 %v191, %v201
  %208 = vrot.lane.b32.xlu0 %v204, 32
  %v209 = vpop.permute.xlu0 %208
  %210 = vrot.lane.b32.xlu0 %v205, 32
  %v211 = vpop.permute.xlu0 %210
  %v214 = vadd.f32 %v194, %v209
  %v215 = vadd.f32 %v195, %v211
  %v216 = vtanh.pop %v214
  %v217 = vtanh.pop %v215
  %220 = vrot.lane.b32.xlu0 %v216, 64
  %v221 = vpop.permute.xlu0 %220
  %222 = vrot.lane.b32.xlu0 %v217, 64
  %v223 = vpop.permute.xlu0 %222
  %v226 = vmul.f32 %v189, %v221
  %v227 = vmul.f32 %v191, %v223
  %v228 = vpack.c.bf16 %v226, %v226
  %v229 = vpack.c.bf16 %v227, %v227
  %v232 = vunpack.c.l.b16 %v228
  %v233 = vunpack.c.l.b16 %v229
  %v234 = vrot.slane %v233, 7
  %vm235 = vcmask 1041409
  %v236 = vsel %vm235, %v234, %v232
  %v237 = vpack.c.b16 %v236, %v236
  %238 = vrot.lane.b32.xlu0 %v237, 32
  %v239 = vpop.permute.xlu0 %238
  %v244 = vunpack.c.l.b16 %v43
  %v245 = vunpack.c.l.b16 %v44
  %v246 = vunpack.c.l.b16 %v45
  %v247 = vunpack.c.l.b16 %v46
  %v248 = vpack.c.b16 %v245, %v244
  %v249 = vpack.c.b16 %v247, %v246
  %v253 = vsel %vm74, %v239, 0
  %255 = vmatprep.subr.bf16.mxu0 0
  %256 = vmatpush1.bf16.msra.mxu0 %v248
  %257 = vmatprep.subr.bf16.mxu0 0
  %258 = vmatpush1.bf16.msra.mxu0 %v249
  %259 = vmatprep.subr.bf16.mxu0 0
  %260 = vmatpush1.bf16.msra.mxu0 0
  %261 = vmatprep.subr.bf16.mxu0 0
  %262 = vmatpush1.bf16.msra.mxu0 0
  %263 = vmatprep.subr.bf16.mxu0 0
  %264 = vmatpush1.bf16.msra.mxu0 0
  %265 = vmatprep.subr.bf16.mxu0 0
  %266 = vmatpush1.bf16.msra.mxu0 0
  %267 = vmatprep.subr.bf16.mxu0 0
  %268 = vmatpush1.bf16.msra.mxu0 0
  %269 = vmatprep.subr.bf16.mxu0 0
  %270 = vmatpush1.bf16.msra.mxu0 0
  %271 = vmatprep.subr.bf16.mxu0 0
  %272 = vmatpush1.bf16.msra.mxu0 0
  %273 = vmatprep.subr.bf16.mxu0 0
  %274 = vmatpush1.bf16.msra.mxu0 0
  %275 = vmatprep.subr.bf16.mxu0 0
  %276 = vmatpush1.bf16.msra.mxu0 0
  %277 = vmatprep.subr.bf16.mxu0 0
  %278 = vmatpush1.bf16.msra.mxu0 0
  %279 = vmatprep.subr.bf16.mxu0 0
  %280 = vmatpush1.bf16.msra.mxu0 0
  %281 = vmatprep.subr.bf16.mxu0 0
  %282 = vmatpush1.bf16.msra.mxu0 0
  %283 = vmatprep.subr.bf16.mxu0 0
  %284 = vmatpush1.bf16.msra.mxu0 0
  %285 = vmatprep.subr.bf16.mxu0 0
  %286 = vmatpush1.bf16.msra.mxu0 0
  %287 = vmatprep.mubr.bf16.mxu0 0
  %288 = vmatmul.mubr.bf16.gmra.mrb[0].mxu0 %v253
  %v289 = vpop.f32.mrb[0].mxu0
  %v290 = vadd.f32 0.0, %v289
  %v291 = vpop.f32.mrb[0].mxu0
  %v292 = vpop.f32.mrb[0].mxu0
  %v293 = vpop.f32.mrb[0].mxu0
  %294 = vdwg.mxu0
  %v299 = vunpack.c.l.b16 %v47
  %v300 = vunpack.c.l.b16 %v48
  %v301 = vunpack.c.l.b16 %v49
  %v302 = vunpack.c.l.b16 %v50
  %v303 = vpack.c.b16 %v300, %v299
  %v304 = vpack.c.b16 %v302, %v301
  %307 = vmatprep.subr.bf16.mxu0 0
  %308 = vmatpush1.bf16.msra.mxu0 %v303
  %309 = vmatprep.subr.bf16.mxu0 0
  %310 = vmatpush1.bf16.msra.mxu0 %v304
  %311 = vmatprep.subr.bf16.mxu0 0
  %312 = vmatpush1.bf16.msra.mxu0 0
  %313 = vmatprep.subr.bf16.mxu0 0
  %314 = vmatpush1.bf16.msra.mxu0 0
  %315 = vmatprep.subr.bf16.mxu0 0
  %316 = vmatpush1.bf16.msra.mxu0 0
  %317 = vmatprep.subr.bf16.mxu0 0
  %318 = vmatpush1.bf16.msra.mxu0 0
  %319 = vmatprep.subr.bf16.mxu0 0
  %320 = vmatpush1.bf16.msra.mxu0 0
  %321 = vmatprep.subr.bf16.mxu0 0
  %322 = vmatpush1.bf16.msra.mxu0 0
  %323 = vmatprep.subr.bf16.mxu0 0
  %324 = vmatpush1.bf16.msra.mxu0 0
  %325 = vmatprep.subr.bf16.mxu0 0
  %326 = vmatpush1.bf16.msra.mxu0 0
  %327 = vmatprep.subr.bf16.mxu0 0
  %328 = vmatpush1.bf16.msra.mxu0 0
  %329 = vmatprep.subr.bf16.mxu0 0
  %330 = vmatpush1.bf16.msra.mxu0 0
  %331 = vmatprep.subr.bf16.mxu0 0
  %332 = vmatpush1.bf16.msra.mxu0 0
  %333 = vmatprep.subr.bf16.mxu0 0
  %334 = vmatpush1.bf16.msra.mxu0 0
  %335 = vmatprep.subr.bf16.mxu0 0
  %336 = vmatpush1.bf16.msra.mxu0 0
  %337 = vmatprep.subr.bf16.mxu0 0
  %338 = vmatpush1.bf16.msra.mxu0 0
  %339 = vmatprep.mubr.bf16.mxu0 0
  %340 = vmatmul.mubr.bf16.gmra.mrb[0].mxu0 %v132
  %v341 = vpop.f32.mrb[0].mxu0
  %v342 = vadd.f32 %v290, %v341
  %v343 = vpop.f32.mrb[0].mxu0
  %v344 = vpop.f32.mrb[0].mxu0
  %v345 = vpop.f32.mrb[0].mxu0
  %346 = vdwg.mxu0
  %v348 = vlaneseq
  %v349 = vshrl.u32 %v348, 7
  %v350 = vsub.s32 0, %v349
  %v351 = vrot.slane %v52, %v350
  %v353 = vadd.f32 %v342, %v351
  %v354 = vxor.u32 %v353, 2147483648
  %v355 = vmul.f32 %v354, 1.442695
  %v356 = vpow.pop %v355
  %v357 = vadd.f32 %v356, 1.0
  %v358 = vrcp.pop %v357
  %v359 = vmul.f32 1.0, %v358
  %v360 = vtanh.pop %v353
  %v361 = vmul.f32 %v359, 0.0
  %363 = vrot.lane.b32.xlu0 %v360, 64
  %v364 = vpop.permute.xlu0 %363
  %v366 = vmul.f32 %v359, %v364
  %368 = vrot.lane.b32.xlu0 %v366, 32
  %v369 = vpop.permute.xlu0 %368
  %v371 = vadd.f32 %v361, %v369
  %v372 = vtanh.pop %v371
  %374 = vrot.lane.b32.xlu0 %v372, 64
  %v375 = vpop.permute.xlu0 %374
  %v377 = vmul.f32 %v359, %v375
  %v378 = vadd.f32 %v377, 0.0
  %v379 = vpack.c.bf16 %v377, %v377
  %380 = vmatprep.subr.bf16.mxu0 0
  %381 = vmatpush1.bf16.msra.mxu0 %v127
  %382 = vmatprep.subr.bf16.mxu0 0
  %383 = vmatpush1.bf16.msra.mxu0 %v128
  %384 = vmatprep.subr.bf16.mxu0 0
  %385 = vmatpush1.bf16.msra.mxu0 0
  %386 = vmatprep.subr.bf16.mxu0 0
  %387 = vmatpush1.bf16.msra.mxu0 0
  %388 = vmatprep.subr.bf16.mxu0 0
  %389 = vmatpush1.bf16.msra.mxu0 0
  %390 = vmatprep.subr.bf16.mxu0 0
  %391 = vmatpush1.bf16.msra.mxu0 0
  %392 = vmatprep.subr.bf16.mxu0 0
  %393 = vmatpush1.bf16.msra.mxu0 0
  %394 = vmatprep.subr.bf16.mxu0 0
  %395 = vmatpush1.bf16.msra.mxu0 0
  %396 = vmatprep.subr.bf16.mxu0 0
  %397 = vmatpush1.bf16.msra.mxu0 0
  %398 = vmatprep.subr.bf16.mxu0 0
  %399 = vmatpush1.bf16.msra.mxu0 0
  %400 = vmatprep.subr.bf16.mxu0 0
  %401 = vmatpush1.bf16.msra.mxu0 0
  %402 = vmatprep.subr.bf16.mxu0 0
  %403 = vmatpush1.bf16.msra.mxu0 0
  %404 = vmatprep.subr.bf16.mxu0 0
  %405 = vmatpush1.bf16.msra.mxu0 0
  %406 = vmatprep.subr.bf16.mxu0 0
  %407 = vmatpush1.bf16.msra.mxu0 0
  %408 = vmatprep.subr.bf16.mxu0 0
  %409 = vmatpush1.bf16.msra.mxu0 0
  %410 = vmatprep.subr.bf16.mxu0 0
  %411 = vmatpush1.bf16.msra.mxu0 0
  %412 = vmatprep.mubr.bf16.mxu0 0
  %413 = vmatmul.mubr.bf16.gmra.mrb[0].mxu0 %v253
  %v414 = vpop.f32.mrb[0].mxu0
  %v415 = vadd.f32 0.0, %v414
  %v416 = vpop.f32.mrb[0].mxu0
  %v417 = vpop.f32.mrb[0].mxu0
  %v418 = vpop.f32.mrb[0].mxu0
  %419 = vdwg.mxu0
  %v421 = vrot.slane %v415, 7
  %v424 = vadd.f32 %v113, %v421
  %v425 = vadd.f32 %v116, %v415
  %v426 = vxor.u32 %v424, 2147483648
  %v427 = vxor.u32 %v425, 2147483648
  %v428 = vmul.f32 %v426, 1.442695
  %v429 = vpow.pop %v428
  %v430 = vmul.f32 %v427, 1.442695
  %v431 = vpow.pop %v430
  %v432 = vadd.f32 %v429, 1.0
  %v433 = vadd.f32 %v431, 1.0
  %v434 = vrcp.pop %v432
  %v435 = vmul.f32 1.0, %v434
  %v436 = vrcp.pop %v433
  %v437 = vmul.f32 1.0, %v436
  %v438 = vtanh.pop %v424
  %v439 = vtanh.pop %v425
  %v442 = vrot.slane %v214, 7
  %v443 = vrot.slane %v215, 7
  %v446 = vmul.f32 %v435, %v442
  %v447 = vmul.f32 %v437, %v443
  %450 = vrot.lane.b32.xlu0 %v438, 64
  %v451 = vpop.permute.xlu0 %450
  %452 = vrot.lane.b32.xlu0 %v439, 64
  %v453 = vpop.permute.xlu0 %452
  %v456 = vmul.f32 %v435, %v451
  %v457 = vmul.f32 %v437, %v453
  %460 = vrot.lane.b32.xlu0 %v456, 32
  %v461 = vpop.permute.xlu0 %460
  %462 = vrot.lane.b32.xlu0 %v457, 32
  %v463 = vpop.permute.xlu0 %462
  %v466 = vadd.f32 %v446, %v461
  %v467 = vadd.f32 %v447, %v463
  %v468 = vtanh.pop %v466
  %v469 = vtanh.pop %v467
  %472 = vrot.lane.b32.xlu0 %v468, 64
  %v473 = vpop.permute.xlu0 %472
  %474 = vrot.lane.b32.xlu0 %v469, 64
  %v475 = vpop.permute.xlu0 %474
  %v478 = vmul.f32 %v435, %v473
  %v479 = vmul.f32 %v437, %v475
  %v480 = vpack.c.bf16 %v478, %v478
  %v481 = vpack.c.bf16 %v479, %v479
  %v484 = vunpack.c.l.b16 %v480
  %v485 = vunpack.c.l.b16 %v481
  %v486 = vrot.slane %v484, 1
  %v487 = vsel %vm235, %v485, %v486
  %v488 = vpack.c.b16 %v487, %v487
  %489 = vrot.lane.b32.xlu0 %v488, 32
  %v490 = vpop.permute.xlu0 %489
  %v492 = vsel %vm74, %v490, 0
  %494 = vmatprep.subr.bf16.mxu0 0
  %495 = vmatpush1.bf16.msra.mxu0 %v248
  %496 = vmatprep.subr.bf16.mxu0 0
  %497 = vmatpush1.bf16.msra.mxu0 %v249
  %498 = vmatprep.subr.bf16.mxu0 0
  %499 = vmatpush1.bf16.msra.mxu0 0
  %500 = vmatprep.subr.bf16.mxu0 0
  %501 = vmatpush1.bf16.msra.mxu0 0
  %502 = vmatprep.subr.bf16.mxu0 0
  %503 = vmatpush1.bf16.msra.mxu0 0
  %504 = vmatprep.subr.bf16.mxu0 0
  %505 = vmatpush1.bf16.msra.mxu0 0
  %506 = vmatprep.subr.bf16.mxu0 0
  %507 = vmatpush1.bf16.msra.mxu0 0
  %508 = vmatprep.subr.bf16.mxu0 0
  %509 = vmatpush1.bf16.msra.mxu0 0
  %510 = vmatprep.subr.bf16.mxu0 0
  %511 = vmatpush1.bf16.msra.mxu0 0
  %512 = vmatprep.subr.bf16.mxu0 0
  %513 = vmatpush1.bf16.msra.mxu0 0
  %514 = vmatprep.subr.bf16.mxu0 0
  %515 = vmatpush1.bf16.msra.mxu0 0
  %516 = vmatprep.subr.bf16.mxu0 0
  %517 = vmatpush1.bf16.msra.mxu0 0
  %518 = vmatprep.subr.bf16.mxu0 0
  %519 = vmatpush1.bf16.msra.mxu0 0
  %520 = vmatprep.subr.bf16.mxu0 0
  %521 = vmatpush1.bf16.msra.mxu0 0
  %522 = vmatprep.subr.bf16.mxu0 0
  %523 = vmatpush1.bf16.msra.mxu0 0
  %524 = vmatprep.subr.bf16.mxu0 0
  %525 = vmatpush1.bf16.msra.mxu0 0
  %526 = vmatprep.mubr.bf16.mxu0 0
  %527 = vmatmul.mubr.bf16.gmra.mrb[0].mxu0 %v492
  %v528 = vpop.f32.mrb[0].mxu0
  %v529 = vadd.f32 0.0, %v528
  %v530 = vpop.f32.mrb[0].mxu0
  %v531 = vpop.f32.mrb[0].mxu0
  %v532 = vpop.f32.mrb[0].mxu0
  %533 = vdwg.mxu0
  %535 = vrot.lane.b32.xlu0 %v379, 32
  %v536 = vpop.permute.xlu0 %535
  %v538 = vsel %vm74, %v536, 0
  %540 = vmatprep.subr.bf16.mxu0 0
  %541 = vmatpush1.bf16.msra.mxu0 %v303
  %542 = vmatprep.subr.bf16.mxu0 0
  %543 = vmatpush1.bf16.msra.mxu0 %v304
  %544 = vmatprep.subr.bf16.mxu0 0
  %545 = vmatpush1.bf16.msra.mxu0 0
  %546 = vmatprep.subr.bf16.mxu0 0
  %547 = vmatpush1.bf16.msra.mxu0 0
  %548 = vmatprep.subr.bf16.mxu0 0
  %549 = vmatpush1.bf16.msra.mxu0 0
  %550 = vmatprep.subr.bf16.mxu0 0
  %551 = vmatpush1.bf16.msra.mxu0 0
  %552 = vmatprep.subr.bf16.mxu0 0
  %553 = vmatpush1.bf16.msra.mxu0 0
  %554 = vmatprep.subr.bf16.mxu0 0
  %555 = vmatpush1.bf16.msra.mxu0 0
  %556 = vmatprep.subr.bf16.mxu0 0
  %557 = vmatpush1.bf16.msra.mxu0 0
  %558 = vmatprep.subr.bf16.mxu0 0
  %559 = vmatpush1.bf16.msra.mxu0 0
  %560 = vmatprep.subr.bf16.mxu0 0
  %561 = vmatpush1.bf16.msra.mxu0 0
  %562 = vmatprep.subr.bf16.mxu0 0
  %563 = vmatpush1.bf16.msra.mxu0 0
  %564 = vmatprep.subr.bf16.mxu0 0
  %565 = vmatpush1.bf16.msra.mxu0 0
  %566 = vmatprep.subr.bf16.mxu0 0
  %567 = vmatpush1.bf16.msra.mxu0 0
  %568 = vmatprep.subr.bf16.mxu0 0
  %569 = vmatpush1.bf16.msra.mxu0 0
  %570 = vmatprep.subr.bf16.mxu0 0
  %571 = vmatpush1.bf16.msra.mxu0 0
  %572 = vmatprep.mubr.bf16.mxu0 0
  %573 = vmatmul.mubr.bf16.gmra.mrb[0].mxu0 %v538
  %v574 = vpop.f32.mrb[0].mxu0
  %v575 = vadd.f32 %v529, %v574
  %v576 = vpop.f32.mrb[0].mxu0
  %v577 = vpop.f32.mrb[0].mxu0
  %v578 = vpop.f32.mrb[0].mxu0
  %579 = vdwg.mxu0
  %v580 = vadd.f32 %v575, %v351
  %v581 = vxor.u32 %v580, 2147483648
  %v582 = vmul.f32 %v581, 1.442695
  %v583 = vpow.pop %v582
  %v584 = vadd.f32 %v583, 1.0
  %v585 = vrcp.pop %v584
  %v586 = vmul.f32 1.0, %v585
  %v587 = vtanh.pop %v580
  %v588 = vmul.f32 %v586, %v371
  %590 = vrot.lane.b32.xlu0 %v587, 64
  %v591 = vpop.permute.xlu0 %590
  %v593 = vmul.f32 %v586, %v591
  %595 = vrot.lane.b32.xlu0 %v593, 32
  %v596 = vpop.permute.xlu0 %595
  %v598 = vadd.f32 %v588, %v596
  %v599 = vtanh.pop %v598
  %601 = vrot.lane.b32.xlu0 %v599, 64
  %v602 = vpop.permute.xlu0 %601
  %v604 = vmul.f32 %v586, %v602
  %v605 = vadd.f32 %v378, %v604
  %v606 = vpack.c.bf16 %v604, %v604
  %607 = vmatprep.subr.bf16.mxu0 0
  %608 = vmatpush1.bf16.msra.mxu0 %v127
  %609 = vmatprep.subr.bf16.mxu0 0
  %610 = vmatpush1.bf16.msra.mxu0 %v128
  %611 = vmatprep.subr.bf16.mxu0 0
  %612 = vmatpush1.bf16.msra.mxu0 0
  %613 = vmatprep.subr.bf16.mxu0 0
  %614 = vmatpush1.bf16.msra.mxu0 0
  %615 = vmatprep.subr.bf16.mxu0 0
  %616 = vmatpush1.bf16.msra.mxu0 0
  %617 = vmatprep.subr.bf16.mxu0 0
  %618 = vmatpush1.bf16.msra.mxu0 0
  %619 = vmatprep.subr.bf16.mxu0 0
  %620 = vmatpush1.bf16.msra.mxu0 0
  %621 = vmatprep.subr.bf16.mxu0 0
  %622 = vmatpush1.bf16.msra.mxu0 0
  %623 = vmatprep.subr.bf16.mxu0 0
  %624 = vmatpush1.bf16.msra.mxu0 0
  %625 = vmatprep.subr.bf16.mxu0 0
  %626 = vmatpush1.bf16.msra.mxu0 0
  %627 = vmatprep.subr.bf16.mxu0 0
  %628 = vmatpush1.bf16.msra.mxu0 0
  %629 = vmatprep.subr.bf16.mxu0 0
  %630 = vmatpush1.bf16.msra.mxu0 0
  %631 = vmatprep.subr.bf16.mxu0 0
  %632 = vmatpush1.bf16.msra.mxu0 0
  %633 = vmatprep.subr.bf16.mxu0 0
  %634 = vmatpush1.bf16.msra.mxu0 0
  %635 = vmatprep.subr.bf16.mxu0 0
  %636 = vmatpush1.bf16.msra.mxu0 0
  %637 = vmatprep.subr.bf16.mxu0 0
  %638 = vmatpush1.bf16.msra.mxu0 0
  %639 = vmatprep.mubr.bf16.mxu0 0
  %640 = vmatmul.mubr.bf16.gmra.mrb[0].mxu0 %v492
  %v641 = vpop.f32.mrb[0].mxu0
  %v642 = vadd.f32 0.0, %v641
  %v643 = vpop.f32.mrb[0].mxu0
  %v644 = vpop.f32.mrb[0].mxu0
  %v645 = vpop.f32.mrb[0].mxu0
  %646 = vdwg.mxu0
  %v648 = vrot.slane %v642, 6
  %v649 = vrot.slane %v642, 7
  %v652 = vadd.f32 %v113, %v648
  %v653 = vadd.f32 %v116, %v649
  %v654 = vxor.u32 %v652, 2147483648
  %v655 = vxor.u32 %v653, 2147483648
  %v656 = vmul.f32 %v654, 1.442695
  %v657 = vpow.pop %v656
  %v658 = vmul.f32 %v655, 1.442695
  %v659 = vpow.pop %v658
  %v660 = vadd.f32 %v657, 1.0
  %v661 = vadd.f32 %v659, 1.0
  %v662 = vrcp.pop %v660
  %v663 = vmul.f32 1.0, %v662
  %v664 = vrcp.pop %v661
  %v665 = vmul.f32 1.0, %v664
  %v666 = vtanh.pop %v652
  %v667 = vtanh.pop %v653
  %v670 = vrot.slane %v466, 7
  %v671 = vrot.slane %v467, 7
  %v674 = vmul.f32 %v663, %v670
  %v675 = vmul.f32 %v665, %v671
  %678 = vrot.lane.b32.xlu0 %v666, 64
  %v679 = vpop.permute.xlu0 %678
  %680 = vrot.lane.b32.xlu0 %v667, 64
  %v681 = vpop.permute.xlu0 %680
  %v684 = vmul.f32 %v663, %v679
  %v685 = vmul.f32 %v665, %v681
  %688 = vrot.lane.b32.xlu0 %v684, 32
  %v689 = vpop.permute.xlu0 %688
  %690 = vrot.lane.b32.xlu0 %v685, 32
  %v691 = vpop.permute.xlu0 %690
  %v694 = vadd.f32 %v674, %v689
  %v695 = vadd.f32 %v675, %v691
  %v696 = vtanh.pop %v694
  %v697 = vtanh.pop %v695
  %700 = vrot.lane.b32.xlu0 %v696, 64
  %v701 = vpop.permute.xlu0 %700
  %702 = vrot.lane.b32.xlu0 %v697, 64
  %v703 = vpop.permute.xlu0 %702
  %v706 = vmul.f32 %v663, %v701
  %v707 = vmul.f32 %v665, %v703
  %v708 = vpack.c.bf16 %v706, %v706
  %v709 = vpack.c.bf16 %v707, %v707
  %v712 = vunpack.c.l.b16 %v708
  %v713 = vunpack.c.l.b16 %v709
  %v714 = vrot.slane %v712, 2
  %v715 = vrot.slane %v713, 1
  %v716 = vsel %vm235, %v715, %v714
  %v717 = vpack.c.b16 %v716, %v716
  %718 = vrot.lane.b32.xlu0 %v717, 32
  %v719 = vpop.permute.xlu0 %718
  %v721 = vsel %vm74, %v719, 0
  %723 = vmatprep.subr.bf16.mxu0 0
  %724 = vmatpush1.bf16.msra.mxu0 %v248
  %725 = vmatprep.subr.bf16.mxu0 0
  %726 = vmatpush1.bf16.msra.mxu0 %v249
  %727 = vmatprep.subr.bf16.mxu0 0
  %728 = vmatpush1.bf16.msra.mxu0 0
  %729 = vmatprep.subr.bf16.mxu0 0
  %730 = vmatpush1.bf16.msra.mxu0 0
  %731 = vmatprep.subr.bf16.mxu0 0
  %732 = vmatpush1.bf16.msra.mxu0 0
  %733 = vmatprep.subr.bf16.mxu0 0
  %734 = vmatpush1.bf16.msra.mxu0 0
  %735 = vmatprep.subr.bf16.mxu0 0
  %736 = vmatpush1.bf16.msra.mxu0 0
  %737 = vmatprep.subr.bf16.mxu0 0
  %738 = vmatpush1.bf16.msra.mxu0 0
  %739 = vmatprep.subr.bf16.mxu0 0
  %740 = vmatpush1.bf16.msra.mxu0 0
  %741 = vmatprep.subr.bf16.mxu0 0
  %742 = vmatpush1.bf16.msra.mxu0 0
  %743 = vmatprep.subr.bf16.mxu0 0
  %744 = vmatpush1.bf16.msra.mxu0 0
  %745 = vmatprep.subr.bf16.mxu0 0
  %746 = vmatpush1.bf16.msra.mxu0 0
  %747 = vmatprep.subr.bf16.mxu0 0
  %748 = vmatpush1.bf16.msra.mxu0 0
  %749 = vmatprep.subr.bf16.mxu0 0
  %750 = vmatpush1.bf16.msra.mxu0 0
  %751 = vmatprep.subr.bf16.mxu0 0
  %752 = vmatpush1.bf16.msra.mxu0 0
  %753 = vmatprep.subr.bf16.mxu0 0
  %754 = vmatpush1.bf16.msra.mxu0 0
  %755 = vmatprep.mubr.bf16.mxu0 0
  %756 = vmatmul.mubr.bf16.gmra.mrb[0].mxu0 %v721
  %v757 = vpop.f32.mrb[0].mxu0
  %v758 = vadd.f32 0.0, %v757
  %v759 = vpop.f32.mrb[0].mxu0
  %v760 = vpop.f32.mrb[0].mxu0
  %v761 = vpop.f32.mrb[0].mxu0
  %762 = vdwg.mxu0
  %764 = vrot.lane.b32.xlu0 %v606, 32
  %v765 = vpop.permute.xlu0 %764
  %v767 = vsel %vm74, %v765, 0
  %769 = vmatprep.subr.bf16.mxu0 0
  %770 = vmatpush1.bf16.msra.mxu0 %v303
  %771 = vmatprep.subr.bf16.mxu0 0
  %772 = vmatpush1.bf16.msra.mxu0 %v304
  %773 = vmatprep.subr.bf16.mxu0 0
  %774 = vmatpush1.bf16.msra.mxu0 0
  %775 = vmatprep.subr.bf16.mxu0 0
  %776 = vmatpush1.bf16.msra.mxu0 0
  %777 = vmatprep.subr.bf16.mxu0 0
  %778 = vmatpush1.bf16.msra.mxu0 0
  %779 = vmatprep.subr.bf16.mxu0 0
  %780 = vmatpush1.bf16.msra.mxu0 0
  %781 = vmatprep.subr.bf16.mxu0 0
  %782 = vmatpush1.bf16.msra.mxu0 0
  %783 = vmatprep.subr.bf16.mxu0 0
  %784 = vmatpush1.bf16.msra.mxu0 0
  %785 = vmatprep.subr.bf16.mxu0 0
  %786 = vmatpush1.bf16.msra.mxu0 0
  %787 = vmatprep.subr.bf16.mxu0 0
  %788 = vmatpush1.bf16.msra.mxu0 0
  %789 = vmatprep.subr.bf16.mxu0 0
  %790 = vmatpush1.bf16.msra.mxu0 0
  %791 = vmatprep.subr.bf16.mxu0 0
  %792 = vmatpush1.bf16.msra.mxu0 0
  %793 = vmatprep.subr.bf16.mxu0 0
  %794 = vmatpush1.bf16.msra.mxu0 0
  %795 = vmatprep.subr.bf16.mxu0 0
  %796 = vmatpush1.bf16.msra.mxu0 0
  %797 = vmatprep.subr.bf16.mxu0 0
  %798 = vmatpush1.bf16.msra.mxu0 0
  %799 = vmatprep.subr.bf16.mxu0 0
  %800 = vmatpush1.bf16.msra.mxu0 0
  %801 = vmatprep.mubr.bf16.mxu0 0
  %802 = vmatmul.mubr.bf16.gmra.mrb[0].mxu0 %v767
  %v803 = vpop.f32.mrb[0].mxu0
  %v804 = vadd.f32 %v758, %v803
  %v805 = vpop.f32.mrb[0].mxu0
  %v806 = vpop.f32.mrb[0].mxu0
  %v807 = vpop.f32.mrb[0].mxu0
  %808 = vdwg.mxu0
  %v809 = vadd.f32 %v804, %v351
  %v810 = vxor.u32 %v809, 2147483648
  %v811 = vmul.f32 %v810, 1.442695
  %v812 = vpow.pop %v811
  %v813 = vadd.f32 %v812, 1.0
  %v814 = vrcp.pop %v813
  %v815 = vmul.f32 1.0, %v814
  %v816 = vtanh.pop %v809
  %v817 = vmul.f32 %v815, %v598
  %819 = vrot.lane.b32.xlu0 %v816, 64
  %v820 = vpop.permute.xlu0 %819
  %v822 = vmul.f32 %v815, %v820
  %824 = vrot.lane.b32.xlu0 %v822, 32
  %v825 = vpop.permute.xlu0 %824
  %v827 = vadd.f32 %v817, %v825
  %v828 = vtanh.pop %v827
  %830 = vrot.lane.b32.xlu0 %v828, 64
  %v831 = vpop.permute.xlu0 %830
  %v833 = vmul.f32 %v815, %v831
  %v834 = vadd.f32 %v605, %v833
  %v835 = vpack.c.bf16 %v833, %v833
  %836 = vmatprep.subr.bf16.mxu0 0
  %837 = vmatpush1.bf16.msra.mxu0 %v127
  %838 = vmatprep.subr.bf16.mxu0 0
  %839 = vmatpush1.bf16.msra.mxu0 %v128
  %840 = vmatprep.subr.bf16.mxu0 0
  %841 = vmatpush1.bf16.msra.mxu0 0
  %842 = vmatprep.subr.bf16.mxu0 0
  %843 = vmatpush1.bf16.msra.mxu0 0
  %844 = vmatprep.subr.bf16.mxu0 0
  %845 = vmatpush1.bf16.msra.mxu0 0
  %846 = vmatprep.subr.bf16.mxu0 0
  %847 = vmatpush1.bf16.msra.mxu0 0
  %848 = vmatprep.subr.bf16.mxu0 0
  %849 = vmatpush1.bf16.msra.mxu0 0
  %850 = vmatprep.subr.bf16.mxu0 0
  %851 = vmatpush1.bf16.msra.mxu0 0
  %852 = vmatprep.subr.bf16.mxu0 0
  %853 = vmatpush1.bf16.msra.mxu0 0
  %854 = vmatprep.subr.bf16.mxu0 0
  %855 = vmatpush1.bf16.msra.mxu0 0
  %856 = vmatprep.subr.bf16.mxu0 0
  %857 = vmatpush1.bf16.msra.mxu0 0
  %858 = vmatprep.subr.bf16.mxu0 0
  %859 = vmatpush1.bf16.msra.mxu0 0
  %860 = vmatprep.subr.bf16.mxu0 0
  %861 = vmatpush1.bf16.msra.mxu0 0
  %862 = vmatprep.subr.bf16.mxu0 0
  %863 = vmatpush1.bf16.msra.mxu0 0
  %864 = vmatprep.subr.bf16.mxu0 0
  %865 = vmatpush1.bf16.msra.mxu0 0
  %866 = vmatprep.subr.bf16.mxu0 0
  %867 = vmatpush1.bf16.msra.mxu0 0
  %868 = vmatprep.mubr.bf16.mxu0 0
  %869 = vmatmul.mubr.bf16.gmra.mrb[0].mxu0 %v721
  %v870 = vpop.f32.mrb[0].mxu0
  %v871 = vadd.f32 0.0, %v870
  %v872 = vpop.f32.mrb[0].mxu0
  %v873 = vpop.f32.mrb[0].mxu0
  %v874 = vpop.f32.mrb[0].mxu0
  %875 = vdwg.mxu0
  %v877 = vrot.slane %v871, 5
  %v878 = vrot.slane %v871, 6
  %v881 = vadd.f32 %v113, %v877
  %v882 = vadd.f32 %v116, %v878
  %v883 = vxor.u32 %v881, 2147483648
  %v884 = vxor.u32 %v882, 2147483648
  %v885 = vmul.f32 %v883, 1.442695
  %v886 = vpow.pop %v885
  %v887 = vmul.f32 %v884, 1.442695
  %v888 = vpow.pop %v887
  %v889 = vadd.f32 %v886, 1.0
  %v890 = vadd.f32 %v888, 1.0
  %v891 = vrcp.pop %v889
  %v892 = vmul.f32 1.0, %v891
  %v893 = vrcp.pop %v890
  %v894 = vmul.f32 1.0, %v893
  %v895 = vtanh.pop %v881
  %v896 = vtanh.pop %v882
  %v899 = vrot.slane %v694, 7
  %v900 = vrot.slane %v695, 7
  %v903 = vmul.f32 %v892, %v899
  %v904 = vmul.f32 %v894, %v900
  %907 = vrot.lane.b32.xlu0 %v895, 64
  %v908 = vpop.permute.xlu0 %907
  %909 = vrot.lane.b32.xlu0 %v896, 64
  %v910 = vpop.permute.xlu0 %909
  %v913 = vmul.f32 %v892, %v908
  %v914 = vmul.f32 %v894, %v910
  %917 = vrot.lane.b32.xlu0 %v913, 32
  %v918 = vpop.permute.xlu0 %917
  %919 = vrot.lane.b32.xlu0 %v914, 32
  %v920 = vpop.permute.xlu0 %919
  %v923 = vadd.f32 %v903, %v918
  %v924 = vadd.f32 %v904, %v920
  %v925 = vtanh.pop %v923
  %v926 = vtanh.pop %v924
  %929 = vrot.lane.b32.xlu0 %v925, 64
  %v930 = vpop.permute.xlu0 %929
  %931 = vrot.lane.b32.xlu0 %v926, 64
  %v932 = vpop.permute.xlu0 %931
  %v935 = vmul.f32 %v892, %v930
  %v936 = vmul.f32 %v894, %v932
  %v937 = vpack.c.bf16 %v935, %v935
  %v938 = vpack.c.bf16 %v936, %v936
  %v941 = vunpack.c.l.b16 %v937
  %v942 = vunpack.c.l.b16 %v938
  %v943 = vrot.slane %v941, 3
  %v944 = vrot.slane %v942, 2
  %v945 = vsel %vm235, %v944, %v943
  %v946 = vpack.c.b16 %v945, %v945
  %947 = vrot.lane.b32.xlu0 %v946, 32
  %v948 = vpop.permute.xlu0 %947
  %v950 = vsel %vm74, %v948, 0
  %952 = vmatprep.subr.bf16.mxu0 0
  %953 = vmatpush1.bf16.msra.mxu0 %v248
  %954 = vmatprep.subr.bf16.mxu0 0
  %955 = vmatpush1.bf16.msra.mxu0 %v249
  %956 = vmatprep.subr.bf16.mxu0 0
  %957 = vmatpush1.bf16.msra.mxu0 0
  %958 = vmatprep.subr.bf16.mxu0 0
  %959 = vmatpush1.bf16.msra.mxu0 0
  %960 = vmatprep.subr.bf16.mxu0 0
  %961 = vmatpush1.bf16.msra.mxu0 0
  %962 = vmatprep.subr.bf16.mxu0 0
  %963 = vmatpush1.bf16.msra.mxu0 0
  %964 = vmatprep.subr.bf16.mxu0 0
  %965 = vmatpush1.bf16.msra.mxu0 0
  %966 = vmatprep.subr.bf16.mxu0 0
  %967 = vmatpush1.bf16.msra.mxu0 0
  %968 = vmatprep.subr.bf16.mxu0 0
  %969 = vmatpush1.bf16.msra.mxu0 0
  %970 = vmatprep.subr.bf16.mxu0 0
  %971 = vmatpush1.bf16.msra.mxu0 0
  %972 = vmatprep.subr.bf16.mxu0 0
  %973 = vmatpush1.bf16.msra.mxu0 0
  %974 = vmatprep.subr.bf16.mxu0 0
  %975 = vmatpush1.bf16.msra.mxu0 0
  %976 = vmatprep.subr.bf16.mxu0 0
  %977 = vmatpush1.bf16.msra.mxu0 0
  %978 = vmatprep.subr.bf16.mxu0 0
  %979 = vmatpush1.bf16.msra.mxu0 0
  %980 = vmatprep.subr.bf16.mxu0 0
  %981 = vmatpush1.bf16.msra.mxu0 0
  %982 = vmatprep.subr.bf16.mxu0 0
  %983 = vmatpush1.bf16.msra.mxu0 0
  %984 = vmatprep.mubr.bf16.mxu0 0
  %985 = vmatmul.mubr.bf16.gmra.mrb[0].mxu0 %v950
  %v986 = vpop.f32.mrb[0].mxu0
  %v987 = vadd.f32 0.0, %v986
  %v988 = vpop.f32.mrb[0].mxu0
  %v989 = vpop.f32.mrb[0].mxu0
  %v990 = vpop.f32.mrb[0].mxu0
  %991 = vdwg.mxu0
  %993 = vrot.lane.b32.xlu0 %v835, 32
  %v994 = vpop.permute.xlu0 %993
  %v996 = vsel %vm74, %v994, 0
  %998 = vmatprep.subr.bf16.mxu0 0
  %999 = vmatpush1.bf16.msra.mxu0 %v303
  %1000 = vmatprep.subr.bf16.mxu0 0
  %1001 = vmatpush1.bf16.msra.mxu0 %v304
  %1002 = vmatprep.subr.bf16.mxu0 0
  %1003 = vmatpush1.bf16.msra.mxu0 0
  %1004 = vmatprep.subr.bf16.mxu0 0
  %1005 = vmatpush1.bf16.msra.mxu0 0
  %1006 = vmatprep.subr.bf16.mxu0 0
  %1007 = vmatpush1.bf16.msra.mxu0 0
  %1008 = vmatprep.subr.bf16.mxu0 0
  %1009 = vmatpush1.bf16.msra.mxu0 0
  %1010 = vmatprep.subr.bf16.mxu0 0
  %1011 = vmatpush1.bf16.msra.mxu0 0
  %1012 = vmatprep.subr.bf16.mxu0 0
  %1013 = vmatpush1.bf16.msra.mxu0 0
  %1014 = vmatprep.subr.bf16.mxu0 0
  %1015 = vmatpush1.bf16.msra.mxu0 0
  %1016 = vmatprep.subr.bf16.mxu0 0
  %1017 = vmatpush1.bf16.msra.mxu0 0
  %1018 = vmatprep.subr.bf16.mxu0 0
  %1019 = vmatpush1.bf16.msra.mxu0 0
  %1020 = vmatprep.subr.bf16.mxu0 0
  %1021 = vmatpush1.bf16.msra.mxu0 0
  %1022 = vmatprep.subr.bf16.mxu0 0
  %1023 = vmatpush1.bf16.msra.mxu0 0
  %1024 = vmatprep.subr.bf16.mxu0 0
  %1025 = vmatpush1.bf16.msra.mxu0 0
  %1026 = vmatprep.subr.bf16.mxu0 0
  %1027 = vmatpush1.bf16.msra.mxu0 0
  %1028 = vmatprep.subr.bf16.mxu0 0
  %1029 = vmatpush1.bf16.msra.mxu0 0
  %1030 = vmatprep.mubr.bf16.mxu0 0
  %1031 = vmatmul.mubr.bf16.gmra.mrb[0].mxu0 %v996
  %v1032 = vpop.f32.mrb[0].mxu0
  %v1033 = vadd.f32 %v987, %v1032
  %v1034 = vpop.f32.mrb[0].mxu0
  %v1035 = vpop.f32.mrb[0].mxu0
  %v1036 = vpop.f32.mrb[0].mxu0
  %1037 = vdwg.mxu0
  %v1038 = vadd.f32 %v1033, %v351
  %v1039 = vxor.u32 %v1038, 2147483648
  %v1040 = vmul.f32 %v1039, 1.442695
  %v1041 = vpow.pop %v1040
  %v1042 = vadd.f32 %v1041, 1.0
  %v1043 = vrcp.pop %v1042
  %v1044 = vmul.f32 1.0, %v1043
  %v1045 = vtanh.pop %v1038
  %v1046 = vmul.f32 %v1044, %v827
  %1048 = vrot.lane.b32.xlu0 %v1045, 64
  %v1049 = vpop.permute.xlu0 %1048
  %v1051 = vmul.f32 %v1044, %v1049
  %1053 = vrot.lane.b32.xlu0 %v1051, 32
  %v1054 = vpop.permute.xlu0 %1053
  %v1056 = vadd.f32 %v1046, %v1054
  %v1057 = vtanh.pop %v1056
  %1059 = vrot.lane.b32.xlu0 %v1057, 64
  %v1060 = vpop.permute.xlu0 %1059
  %v1062 = vmul.f32 %v1044, %v1060
  %v1063 = vadd.f32 %v834, %v1062
  %v1064 = vpack.c.bf16 %v1062, %v1062
  %1065 = vmatprep.subr.bf16.mxu0 0
  %1066 = vmatpush1.bf16.msra.mxu0 %v127
  %1067 = vmatprep.subr.bf16.mxu0 0
  %1068 = vmatpush1.bf16.msra.mxu0 %v128
  %1069 = vmatprep.subr.bf16.mxu0 0
  %1070 = vmatpush1.bf16.msra.mxu0 0
  %1071 = vmatprep.subr.bf16.mxu0 0
  %1072 = vmatpush1.bf16.msra.mxu0 0
  %1073 = vmatprep.subr.bf16.mxu0 0
  %1074 = vmatpush1.bf16.msra.mxu0 0
  %1075 = vmatprep.subr.bf16.mxu0 0
  %1076 = vmatpush1.bf16.msra.mxu0 0
  %1077 = vmatprep.subr.bf16.mxu0 0
  %1078 = vmatpush1.bf16.msra.mxu0 0
  %1079 = vmatprep.subr.bf16.mxu0 0
  %1080 = vmatpush1.bf16.msra.mxu0 0
  %1081 = vmatprep.subr.bf16.mxu0 0
  %1082 = vmatpush1.bf16.msra.mxu0 0
  %1083 = vmatprep.subr.bf16.mxu0 0
  %1084 = vmatpush1.bf16.msra.mxu0 0
  %1085 = vmatprep.subr.bf16.mxu0 0
  %1086 = vmatpush1.bf16.msra.mxu0 0
  %1087 = vmatprep.subr.bf16.mxu0 0
  %1088 = vmatpush1.bf16.msra.mxu0 0
  %1089 = vmatprep.subr.bf16.mxu0 0
  %1090 = vmatpush1.bf16.msra.mxu0 0
  %1091 = vmatprep.subr.bf16.mxu0 0
  %1092 = vmatpush1.bf16.msra.mxu0 0
  %1093 = vmatprep.subr.bf16.mxu0 0
  %1094 = vmatpush1.bf16.msra.mxu0 0
  %1095 = vmatprep.subr.bf16.mxu0 0
  %1096 = vmatpush1.bf16.msra.mxu0 0
  %1097 = vmatprep.mubr.bf16.mxu0 0
  %1098 = vmatmul.mubr.bf16.gmra.mrb[0].mxu0 %v950
  %v1099 = vpop.f32.mrb[0].mxu0
  %v1100 = vadd.f32 0.0, %v1099
  %v1101 = vpop.f32.mrb[0].mxu0
  %v1102 = vpop.f32.mrb[0].mxu0
  %v1103 = vpop.f32.mrb[0].mxu0
  %1104 = vdwg.mxu0
  %v1106 = vrot.slane %v1100, 4
  %v1107 = vrot.slane %v1100, 5
  %v1110 = vadd.f32 %v113, %v1106
  %v1111 = vadd.f32 %v116, %v1107
  %v1112 = vxor.u32 %v1110, 2147483648
  %v1113 = vxor.u32 %v1111, 2147483648
  %v1114 = vmul.f32 %v1112, 1.442695
  %v1115 = vpow.pop %v1114
  %v1116 = vmul.f32 %v1113, 1.442695
  %v1117 = vpow.pop %v1116
  %v1118 = vadd.f32 %v1115, 1.0
  %v1119 = vadd.f32 %v1117, 1.0
  %v1120 = vrcp.pop %v1118
  %v1121 = vmul.f32 1.0, %v1120
  %v1122 = vrcp.pop %v1119
  %v1123 = vmul.f32 1.0, %v1122
  %v1124 = vtanh.pop %v1110
  %v1125 = vtanh.pop %v1111
  %v1128 = vrot.slane %v923, 7
  %v1129 = vrot.slane %v924, 7
  %v1132 = vmul.f32 %v1121, %v1128
  %v1133 = vmul.f32 %v1123, %v1129
  %1136 = vrot.lane.b32.xlu0 %v1124, 64
  %v1137 = vpop.permute.xlu0 %1136
  %1138 = vrot.lane.b32.xlu0 %v1125, 64
  %v1139 = vpop.permute.xlu0 %1138
  %v1142 = vmul.f32 %v1121, %v1137
  %v1143 = vmul.f32 %v1123, %v1139
  %1146 = vrot.lane.b32.xlu0 %v1142, 32
  %v1147 = vpop.permute.xlu0 %1146
  %1148 = vrot.lane.b32.xlu0 %v1143, 32
  %v1149 = vpop.permute.xlu0 %1148
  %v1152 = vadd.f32 %v1132, %v1147
  %v1153 = vadd.f32 %v1133, %v1149
  %v1154 = vtanh.pop %v1152
  %v1155 = vtanh.pop %v1153
  %1158 = vrot.lane.b32.xlu0 %v1154, 64
  %v1159 = vpop.permute.xlu0 %1158
  %1160 = vrot.lane.b32.xlu0 %v1155, 64
  %v1161 = vpop.permute.xlu0 %1160
  %v1164 = vmul.f32 %v1121, %v1159
  %v1165 = vmul.f32 %v1123, %v1161
  %v1166 = vpack.c.bf16 %v1164, %v1164
  %v1167 = vpack.c.bf16 %v1165, %v1165
  %v1170 = vunpack.c.l.b16 %v1166
  %v1171 = vunpack.c.l.b16 %v1167
  %v1172 = vrot.slane %v1170, 4
  %v1173 = vrot.slane %v1171, 3
  %v1174 = vsel %vm235, %v1173, %v1172
  %v1175 = vpack.c.b16 %v1174, %v1174
  %1176 = vrot.lane.b32.xlu0 %v1175, 32
  %v1177 = vpop.permute.xlu0 %1176
  %v1179 = vsel %vm74, %v1177, 0
  %1181 = vmatprep.subr.bf16.mxu0 0
  %1182 = vmatpush1.bf16.msra.mxu0 %v248
  %1183 = vmatprep.subr.bf16.mxu0 0
  %1184 = vmatpush1.bf16.msra.mxu0 %v249
  %1185 = vmatprep.subr.bf16.mxu0 0
  %1186 = vmatpush1.bf16.msra.mxu0 0
  %1187 = vmatprep.subr.bf16.mxu0 0
  %1188 = vmatpush1.bf16.msra.mxu0 0
  %1189 = vmatprep.subr.bf16.mxu0 0
  %1190 = vmatpush1.bf16.msra.mxu0 0
  %1191 = vmatprep.subr.bf16.mxu0 0
  %1192 = vmatpush1.bf16.msra.mxu0 0
  %1193 = vmatprep.subr.bf16.mxu0 0
  %1194 = vmatpush1.bf16.msra.mxu0 0
  %1195 = vmatprep.subr.bf16.mxu0 0
  %1196 = vmatpush1.bf16.msra.mxu0 0
  %1197 = vmatprep.subr.bf16.mxu0 0
  %1198 = vmatpush1.bf16.msra.mxu0 0
  %1199 = vmatprep.subr.bf16.mxu0 0
  %1200 = vmatpush1.bf16.msra.mxu0 0
  %1201 = vmatprep.subr.bf16.mxu0 0
  %1202 = vmatpush1.bf16.msra.mxu0 0
  %1203 = vmatprep.subr.bf16.mxu0 0
  %1204 = vmatpush1.bf16.msra.mxu0 0
  %1205 = vmatprep.subr.bf16.mxu0 0
  %1206 = vmatpush1.bf16.msra.mxu0 0
  %1207 = vmatprep.subr.bf16.mxu0 0
  %1208 = vmatpush1.bf16.msra.mxu0 0
  %1209 = vmatprep.subr.bf16.mxu0 0
  %1210 = vmatpush1.bf16.msra.mxu0 0
  %1211 = vmatprep.subr.bf16.mxu0 0
  %1212 = vmatpush1.bf16.msra.mxu0 0
  %1213 = vmatprep.mubr.bf16.mxu0 0
  %1214 = vmatmul.mubr.bf16.gmra.mrb[0].mxu0 %v1179
  %v1215 = vpop.f32.mrb[0].mxu0
  %v1216 = vadd.f32 0.0, %v1215
  %v1217 = vpop.f32.mrb[0].mxu0
  %v1218 = vpop.f32.mrb[0].mxu0
  %v1219 = vpop.f32.mrb[0].mxu0
  %1220 = vdwg.mxu0
  %1222 = vrot.lane.b32.xlu0 %v1064, 32
  %v1223 = vpop.permute.xlu0 %1222
  %v1225 = vsel %vm74, %v1223, 0
  %1227 = vmatprep.subr.bf16.mxu0 0
  %1228 = vmatpush1.bf16.msra.mxu0 %v303
  %1229 = vmatprep.subr.bf16.mxu0 0
  %1230 = vmatpush1.bf16.msra.mxu0 %v304
  %1231 = vmatprep.subr.bf16.mxu0 0
  %1232 = vmatpush1.bf16.msra.mxu0 0
  %1233 = vmatprep.subr.bf16.mxu0 0
  %1234 = vmatpush1.bf16.msra.mxu0 0
  %1235 = vmatprep.subr.bf16.mxu0 0
  %1236 = vmatpush1.bf16.msra.mxu0 0
  %1237 = vmatprep.subr.bf16.mxu0 0
  %1238 = vmatpush1.bf16.msra.mxu0 0
  %1239 = vmatprep.subr.bf16.mxu0 0
  %1240 = vmatpush1.bf16.msra.mxu0 0
  %1241 = vmatprep.subr.bf16.mxu0 0
  %1242 = vmatpush1.bf16.msra.mxu0 0
  %1243 = vmatprep.subr.bf16.mxu0 0
  %1244 = vmatpush1.bf16.msra.mxu0 0
  %1245 = vmatprep.subr.bf16.mxu0 0
  %1246 = vmatpush1.bf16.msra.mxu0 0
  %1247 = vmatprep.subr.bf16.mxu0 0
  %1248 = vmatpush1.bf16.msra.mxu0 0
  %1249 = vmatprep.subr.bf16.mxu0 0
  %1250 = vmatpush1.bf16.msra.mxu0 0
  %1251 = vmatprep.subr.bf16.mxu0 0
  %1252 = vmatpush1.bf16.msra.mxu0 0
  %1253 = vmatprep.subr.bf16.mxu0 0
  %1254 = vmatpush1.bf16.msra.mxu0 0
  %1255 = vmatprep.subr.bf16.mxu0 0
  %1256 = vmatpush1.bf16.msra.mxu0 0
  %1257 = vmatprep.subr.bf16.mxu0 0
  %1258 = vmatpush1.bf16.msra.mxu0 0
  %1259 = vmatprep.mubr.bf16.mxu0 0
  %1260 = vmatmul.mubr.bf16.gmra.mrb[0].mxu0 %v1225
  %v1261 = vpop.f32.mrb[0].mxu0
  %v1262 = vadd.f32 %v1216, %v1261
  %v1263 = vpop.f32.mrb[0].mxu0
  %v1264 = vpop.f32.mrb[0].mxu0
  %v1265 = vpop.f32.mrb[0].mxu0
  %1266 = vdwg.mxu0
  %v1267 = vadd.f32 %v1262, %v351
  %v1268 = vxor.u32 %v1267, 2147483648
  %v1269 = vmul.f32 %v1268, 1.442695
  %v1270 = vpow.pop %v1269
  %v1271 = vadd.f32 %v1270, 1.0
  %v1272 = vrcp.pop %v1271
  %v1273 = vmul.f32 1.0, %v1272
  %v1274 = vtanh.pop %v1267
  %v1275 = vmul.f32 %v1273, %v1056
  %1277 = vrot.lane.b32.xlu0 %v1274, 64
  %v1278 = vpop.permute.xlu0 %1277
  %v1280 = vmul.f32 %v1273, %v1278
  %1282 = vrot.lane.b32.xlu0 %v1280, 32
  %v1283 = vpop.permute.xlu0 %1282
  %v1285 = vadd.f32 %v1275, %v1283
  %v1286 = vtanh.pop %v1285
  %1288 = vrot.lane.b32.xlu0 %v1286, 64
  %v1289 = vpop.permute.xlu0 %1288
  %v1291 = vmul.f32 %v1273, %v1289
  %v1292 = vadd.f32 %v1063, %v1291
  %v1293 = vpack.c.bf16 %v1291, %v1291
  %1294 = vmatprep.subr.bf16.mxu0 0
  %1295 = vmatpush1.bf16.msra.mxu0 %v127
  %1296 = vmatprep.subr.bf16.mxu0 0
  %1297 = vmatpush1.bf16.msra.mxu0 %v128
  %1298 = vmatprep.subr.bf16.mxu0 0
  %1299 = vmatpush1.bf16.msra.mxu0 0
  %1300 = vmatprep.subr.bf16.mxu0 0
  %1301 = vmatpush1.bf16.msra.mxu0 0
  %1302 = vmatprep.subr.bf16.mxu0 0
  %1303 = vmatpush1.bf16.msra.mxu0 0
  %1304 = vmatprep.subr.bf16.mxu0 0
  %1305 = vmatpush1.bf16.msra.mxu0 0
  %1306 = vmatprep.subr.bf16.mxu0 0
  %1307 = vmatpush1.bf16.msra.mxu0 0
  %1308 = vmatprep.subr.bf16.mxu0 0
  %1309 = vmatpush1.bf16.msra.mxu0 0
  %1310 = vmatprep.subr.bf16.mxu0 0
  %1311 = vmatpush1.bf16.msra.mxu0 0
  %1312 = vmatprep.subr.bf16.mxu0 0
  %1313 = vmatpush1.bf16.msra.mxu0 0
  %1314 = vmatprep.subr.bf16.mxu0 0
  %1315 = vmatpush1.bf16.msra.mxu0 0
  %1316 = vmatprep.subr.bf16.mxu0 0
  %1317 = vmatpush1.bf16.msra.mxu0 0
  %1318 = vmatprep.subr.bf16.mxu0 0
  %1319 = vmatpush1.bf16.msra.mxu0 0
  %1320 = vmatprep.subr.bf16.mxu0 0
  %1321 = vmatpush1.bf16.msra.mxu0 0
  %1322 = vmatprep.subr.bf16.mxu0 0
  %1323 = vmatpush1.bf16.msra.mxu0 0
  %1324 = vmatprep.subr.bf16.mxu0 0
  %1325 = vmatpush1.bf16.msra.mxu0 0
  %1326 = vmatprep.mubr.bf16.mxu0 0
  %1327 = vmatmul.mubr.bf16.gmra.mrb[0].mxu0 %v1179
  %v1328 = vpop.f32.mrb[0].mxu0
  %v1329 = vadd.f32 0.0, %v1328
  %v1330 = vpop.f32.mrb[0].mxu0
  %v1331 = vpop.f32.mrb[0].mxu0
  %v1332 = vpop.f32.mrb[0].mxu0
  %1333 = vdwg.mxu0
  %v1335 = vrot.slane %v1329, 3
  %v1336 = vrot.slane %v1329, 4
  %v1339 = vadd.f32 %v113, %v1335
  %v1340 = vadd.f32 %v116, %v1336
  %v1341 = vxor.u32 %v1339, 2147483648
  %v1342 = vxor.u32 %v1340, 2147483648
  %v1343 = vmul.f32 %v1341, 1.442695
  %v1344 = vpow.pop %v1343
  %v1345 = vmul.f32 %v1342, 1.442695
  %v1346 = vpow.pop %v1345
  %v1347 = vadd.f32 %v1344, 1.0
  %v1348 = vadd.f32 %v1346, 1.0
  %v1349 = vrcp.pop %v1347
  %v1350 = vmul.f32 1.0, %v1349
  %v1351 = vrcp.pop %v1348
  %v1352 = vmul.f32 1.0, %v1351
  %v1353 = vtanh.pop %v1339
  %v1354 = vtanh.pop %v1340
  %v1357 = vrot.slane %v1152, 7
  %v1358 = vrot.slane %v1153, 7
  %v1361 = vmul.f32 %v1350, %v1357
  %v1362 = vmul.f32 %v1352, %v1358
  %1365 = vrot.lane.b32.xlu0 %v1353, 64
  %v1366 = vpop.permute.xlu0 %1365
  %1367 = vrot.lane.b32.xlu0 %v1354, 64
  %v1368 = vpop.permute.xlu0 %1367
  %v1371 = vmul.f32 %v1350, %v1366
  %v1372 = vmul.f32 %v1352, %v1368
  %1375 = vrot.lane.b32.xlu0 %v1371, 32
  %v1376 = vpop.permute.xlu0 %1375
  %1377 = vrot.lane.b32.xlu0 %v1372, 32
  %v1378 = vpop.permute.xlu0 %1377
  %v1381 = vadd.f32 %v1361, %v1376
  %v1382 = vadd.f32 %v1362, %v1378
  %v1383 = vtanh.pop %v1381
  %v1384 = vtanh.pop %v1382
  %1387 = vrot.lane.b32.xlu0 %v1383, 64
  %v1388 = vpop.permute.xlu0 %1387
  %1389 = vrot.lane.b32.xlu0 %v1384, 64
  %v1390 = vpop.permute.xlu0 %1389
  %v1393 = vmul.f32 %v1350, %v1388
  %v1394 = vmul.f32 %v1352, %v1390
  %v1395 = vpack.c.bf16 %v1393, %v1393
  %v1396 = vpack.c.bf16 %v1394, %v1394
  %v1399 = vunpack.c.l.b16 %v1395
  %v1400 = vunpack.c.l.b16 %v1396
  %v1401 = vrot.slane %v1399, 5
  %v1402 = vrot.slane %v1400, 4
  %v1403 = vsel %vm235, %v1402, %v1401
  %v1404 = vpack.c.b16 %v1403, %v1403
  %1405 = vrot.lane.b32.xlu0 %v1404, 32
  %v1406 = vpop.permute.xlu0 %1405
  %v1408 = vsel %vm74, %v1406, 0
  %1410 = vmatprep.subr.bf16.mxu0 0
  %1411 = vmatpush1.bf16.msra.mxu0 %v248
  %1412 = vmatprep.subr.bf16.mxu0 0
  %1413 = vmatpush1.bf16.msra.mxu0 %v249
  %1414 = vmatprep.subr.bf16.mxu0 0
  %1415 = vmatpush1.bf16.msra.mxu0 0
  %1416 = vmatprep.subr.bf16.mxu0 0
  %1417 = vmatpush1.bf16.msra.mxu0 0
  %1418 = vmatprep.subr.bf16.mxu0 0
  %1419 = vmatpush1.bf16.msra.mxu0 0
  %1420 = vmatprep.subr.bf16.mxu0 0
  %1421 = vmatpush1.bf16.msra.mxu0 0
  %1422 = vmatprep.subr.bf16.mxu0 0
  %1423 = vmatpush1.bf16.msra.mxu0 0
  %1424 = vmatprep.subr.bf16.mxu0 0
  %1425 = vmatpush1.bf16.msra.mxu0 0
  %1426 = vmatprep.subr.bf16.mxu0 0
  %1427 = vmatpush1.bf16.msra.mxu0 0
  %1428 = vmatprep.subr.bf16.mxu0 0
  %1429 = vmatpush1.bf16.msra.mxu0 0
  %1430 = vmatprep.subr.bf16.mxu0 0
  %1431 = vmatpush1.bf16.msra.mxu0 0
  %1432 = vmatprep.subr.bf16.mxu0 0
  %1433 = vmatpush1.bf16.msra.mxu0 0
  %1434 = vmatprep.subr.bf16.mxu0 0
  %1435 = vmatpush1.bf16.msra.mxu0 0
  %1436 = vmatprep.subr.bf16.mxu0 0
  %1437 = vmatpush1.bf16.msra.mxu0 0
  %1438 = vmatprep.subr.bf16.mxu0 0
  %1439 = vmatpush1.bf16.msra.mxu0 0
  %1440 = vmatprep.subr.bf16.mxu0 0
  %1441 = vmatpush1.bf16.msra.mxu0 0
  %1442 = vmatprep.mubr.bf16.mxu0 0
  %1443 = vmatmul.mubr.bf16.gmra.mrb[0].mxu0 %v1408
  %v1444 = vpop.f32.mrb[0].mxu0
  %v1445 = vadd.f32 0.0, %v1444
  %v1446 = vpop.f32.mrb[0].mxu0
  %v1447 = vpop.f32.mrb[0].mxu0
  %v1448 = vpop.f32.mrb[0].mxu0
  %1449 = vdwg.mxu0
  %1451 = vrot.lane.b32.xlu0 %v1293, 32
  %v1452 = vpop.permute.xlu0 %1451
  %v1454 = vsel %vm74, %v1452, 0
  %1456 = vmatprep.subr.bf16.mxu0 0
  %1457 = vmatpush1.bf16.msra.mxu0 %v303
  %1458 = vmatprep.subr.bf16.mxu0 0
  %1459 = vmatpush1.bf16.msra.mxu0 %v304
  %1460 = vmatprep.subr.bf16.mxu0 0
  %1461 = vmatpush1.bf16.msra.mxu0 0
  %1462 = vmatprep.subr.bf16.mxu0 0
  %1463 = vmatpush1.bf16.msra.mxu0 0
  %1464 = vmatprep.subr.bf16.mxu0 0
  %1465 = vmatpush1.bf16.msra.mxu0 0
  %1466 = vmatprep.subr.bf16.mxu0 0
  %1467 = vmatpush1.bf16.msra.mxu0 0
  %1468 = vmatprep.subr.bf16.mxu0 0
  %1469 = vmatpush1.bf16.msra.mxu0 0
  %1470 = vmatprep.subr.bf16.mxu0 0
  %1471 = vmatpush1.bf16.msra.mxu0 0
  %1472 = vmatprep.subr.bf16.mxu0 0
  %1473 = vmatpush1.bf16.msra.mxu0 0
  %1474 = vmatprep.subr.bf16.mxu0 0
  %1475 = vmatpush1.bf16.msra.mxu0 0
  %1476 = vmatprep.subr.bf16.mxu0 0
  %1477 = vmatpush1.bf16.msra.mxu0 0
  %1478 = vmatprep.subr.bf16.mxu0 0
  %1479 = vmatpush1.bf16.msra.mxu0 0
  %1480 = vmatprep.subr.bf16.mxu0 0
  %1481 = vmatpush1.bf16.msra.mxu0 0
  %1482 = vmatprep.subr.bf16.mxu0 0
  %1483 = vmatpush1.bf16.msra.mxu0 0
  %1484 = vmatprep.subr.bf16.mxu0 0
  %1485 = vmatpush1.bf16.msra.mxu0 0
  %1486 = vmatprep.subr.bf16.mxu0 0
  %1487 = vmatpush1.bf16.msra.mxu0 0
  %1488 = vmatprep.mubr.bf16.mxu0 0
  %1489 = vmatmul.mubr.bf16.gmra.mrb[0].mxu0 %v1454
  %v1490 = vpop.f32.mrb[0].mxu0
  %v1491 = vadd.f32 %v1445, %v1490
  %v1492 = vpop.f32.mrb[0].mxu0
  %v1493 = vpop.f32.mrb[0].mxu0
  %v1494 = vpop.f32.mrb[0].mxu0
  %1495 = vdwg.mxu0
  %v1496 = vadd.f32 %v1491, %v351
  %v1497 = vxor.u32 %v1496, 2147483648
  %v1498 = vmul.f32 %v1497, 1.442695
  %v1499 = vpow.pop %v1498
  %v1500 = vadd.f32 %v1499, 1.0
  %v1501 = vrcp.pop %v1500
  %v1502 = vmul.f32 1.0, %v1501
  %v1503 = vtanh.pop %v1496
  %v1504 = vmul.f32 %v1502, %v1285
  %1506 = vrot.lane.b32.xlu0 %v1503, 64
  %v1507 = vpop.permute.xlu0 %1506
  %v1509 = vmul.f32 %v1502, %v1507
  %1511 = vrot.lane.b32.xlu0 %v1509, 32
  %v1512 = vpop.permute.xlu0 %1511
  %v1514 = vadd.f32 %v1504, %v1512
  %v1515 = vtanh.pop %v1514
  %1517 = vrot.lane.b32.xlu0 %v1515, 64
  %v1518 = vpop.permute.xlu0 %1517
  %v1520 = vmul.f32 %v1502, %v1518
  %v1521 = vadd.f32 %v1292, %v1520
  %v1522 = vpack.c.bf16 %v1520, %v1520
  %1523 = vmatprep.subr.bf16.mxu0 0
  %1524 = vmatpush1.bf16.msra.mxu0 %v127
  %1525 = vmatprep.subr.bf16.mxu0 0
  %1526 = vmatpush1.bf16.msra.mxu0 %v128
  %1527 = vmatprep.subr.bf16.mxu0 0
  %1528 = vmatpush1.bf16.msra.mxu0 0
  %1529 = vmatprep.subr.bf16.mxu0 0
  %1530 = vmatpush1.bf16.msra.mxu0 0
  %1531 = vmatprep.subr.bf16.mxu0 0
  %1532 = vmatpush1.bf16.msra.mxu0 0
  %1533 = vmatprep.subr.bf16.mxu0 0
  %1534 = vmatpush1.bf16.msra.mxu0 0
  %1535 = vmatprep.subr.bf16.mxu0 0
  %1536 = vmatpush1.bf16.msra.mxu0 0
  %1537 = vmatprep.subr.bf16.mxu0 0
  %1538 = vmatpush1.bf16.msra.mxu0 0
  %1539 = vmatprep.subr.bf16.mxu0 0
  %1540 = vmatpush1.bf16.msra.mxu0 0
  %1541 = vmatprep.subr.bf16.mxu0 0
  %1542 = vmatpush1.bf16.msra.mxu0 0
  %1543 = vmatprep.subr.bf16.mxu0 0
  %1544 = vmatpush1.bf16.msra.mxu0 0
  %1545 = vmatprep.subr.bf16.mxu0 0
  %1546 = vmatpush1.bf16.msra.mxu0 0
  %1547 = vmatprep.subr.bf16.mxu0 0
  %1548 = vmatpush1.bf16.msra.mxu0 0
  %1549 = vmatprep.subr.bf16.mxu0 0
  %1550 = vmatpush1.bf16.msra.mxu0 0
  %1551 = vmatprep.subr.bf16.mxu0 0
  %1552 = vmatpush1.bf16.msra.mxu0 0
  %1553 = vmatprep.subr.bf16.mxu0 0
  %1554 = vmatpush1.bf16.msra.mxu0 0
  %1555 = vmatprep.mubr.bf16.mxu0 0
  %1556 = vmatmul.mubr.bf16.gmra.mrb[0].mxu0 %v1408
  %v1557 = vpop.f32.mrb[0].mxu0
  %v1558 = vadd.f32 0.0, %v1557
  %v1559 = vpop.f32.mrb[0].mxu0
  %v1560 = vpop.f32.mrb[0].mxu0
  %v1561 = vpop.f32.mrb[0].mxu0
  %1562 = vdwg.mxu0
  %v1564 = vrot.slane %v1558, 2
  %v1565 = vrot.slane %v1558, 3
  %v1568 = vadd.f32 %v113, %v1564
  %v1569 = vadd.f32 %v116, %v1565
  %v1570 = vxor.u32 %v1568, 2147483648
  %v1571 = vxor.u32 %v1569, 2147483648
  %v1572 = vmul.f32 %v1570, 1.442695
  %v1573 = vpow.pop %v1572
  %v1574 = vmul.f32 %v1571, 1.442695
  %v1575 = vpow.pop %v1574
  %v1576 = vadd.f32 %v1573, 1.0
  %v1577 = vadd.f32 %v1575, 1.0
  %v1578 = vrcp.pop %v1576
  %v1579 = vmul.f32 1.0, %v1578
  %v1580 = vrcp.pop %v1577
  %v1581 = vmul.f32 1.0, %v1580
  %v1582 = vtanh.pop %v1568
  %v1583 = vtanh.pop %v1569
  %v1586 = vrot.slane %v1381, 7
  %v1587 = vrot.slane %v1382, 7
  %v1590 = vmul.f32 %v1579, %v1586
  %v1591 = vmul.f32 %v1581, %v1587
  %1594 = vrot.lane.b32.xlu0 %v1582, 64
  %v1595 = vpop.permute.xlu0 %1594
  %1596 = vrot.lane.b32.xlu0 %v1583, 64
  %v1597 = vpop.permute.xlu0 %1596
  %v1600 = vmul.f32 %v1579, %v1595
  %v1601 = vmul.f32 %v1581, %v1597
  %1604 = vrot.lane.b32.xlu0 %v1600, 32
  %v1605 = vpop.permute.xlu0 %1604
  %1606 = vrot.lane.b32.xlu0 %v1601, 32
  %v1607 = vpop.permute.xlu0 %1606
  %v1610 = vadd.f32 %v1590, %v1605
  %v1611 = vadd.f32 %v1591, %v1607
  %v1612 = vtanh.pop %v1610
  %v1613 = vtanh.pop %v1611
  %1616 = vrot.lane.b32.xlu0 %v1612, 64
  %v1617 = vpop.permute.xlu0 %1616
  %1618 = vrot.lane.b32.xlu0 %v1613, 64
  %v1619 = vpop.permute.xlu0 %1618
  %v1622 = vmul.f32 %v1579, %v1617
  %v1623 = vmul.f32 %v1581, %v1619
  %v1624 = vpack.c.bf16 %v1622, %v1622
  %v1625 = vpack.c.bf16 %v1623, %v1623
  %v1628 = vunpack.c.l.b16 %v1624
  %v1629 = vunpack.c.l.b16 %v1625
  %v1630 = vrot.slane %v1628, 6
  %v1631 = vrot.slane %v1629, 5
  %v1632 = vsel %vm235, %v1631, %v1630
  %v1633 = vpack.c.b16 %v1632, %v1632
  %1634 = vrot.lane.b32.xlu0 %v1633, 32
  %v1635 = vpop.permute.xlu0 %1634
  %v1637 = vsel %vm74, %v1635, 0
  %1639 = vmatprep.subr.bf16.mxu0 0
  %1640 = vmatpush1.bf16.msra.mxu0 %v248
  %1641 = vmatprep.subr.bf16.mxu0 0
  %1642 = vmatpush1.bf16.msra.mxu0 %v249
  %1643 = vmatprep.subr.bf16.mxu0 0
  %1644 = vmatpush1.bf16.msra.mxu0 0
  %1645 = vmatprep.subr.bf16.mxu0 0
  %1646 = vmatpush1.bf16.msra.mxu0 0
  %1647 = vmatprep.subr.bf16.mxu0 0
  %1648 = vmatpush1.bf16.msra.mxu0 0
  %1649 = vmatprep.subr.bf16.mxu0 0
  %1650 = vmatpush1.bf16.msra.mxu0 0
  %1651 = vmatprep.subr.bf16.mxu0 0
  %1652 = vmatpush1.bf16.msra.mxu0 0
  %1653 = vmatprep.subr.bf16.mxu0 0
  %1654 = vmatpush1.bf16.msra.mxu0 0
  %1655 = vmatprep.subr.bf16.mxu0 0
  %1656 = vmatpush1.bf16.msra.mxu0 0
  %1657 = vmatprep.subr.bf16.mxu0 0
  %1658 = vmatpush1.bf16.msra.mxu0 0
  %1659 = vmatprep.subr.bf16.mxu0 0
  %1660 = vmatpush1.bf16.msra.mxu0 0
  %1661 = vmatprep.subr.bf16.mxu0 0
  %1662 = vmatpush1.bf16.msra.mxu0 0
  %1663 = vmatprep.subr.bf16.mxu0 0
  %1664 = vmatpush1.bf16.msra.mxu0 0
  %1665 = vmatprep.subr.bf16.mxu0 0
  %1666 = vmatpush1.bf16.msra.mxu0 0
  %1667 = vmatprep.subr.bf16.mxu0 0
  %1668 = vmatpush1.bf16.msra.mxu0 0
  %1669 = vmatprep.subr.bf16.mxu0 0
  %1670 = vmatpush1.bf16.msra.mxu0 0
  %1671 = vmatprep.mubr.bf16.mxu0 0
  %1672 = vmatmul.mubr.bf16.gmra.mrb[0].mxu0 %v1637
  %v1673 = vpop.f32.mrb[0].mxu0
  %v1674 = vadd.f32 0.0, %v1673
  %v1675 = vpop.f32.mrb[0].mxu0
  %v1676 = vpop.f32.mrb[0].mxu0
  %v1677 = vpop.f32.mrb[0].mxu0
  %1678 = vdwg.mxu0
  %1680 = vrot.lane.b32.xlu0 %v1522, 32
  %v1681 = vpop.permute.xlu0 %1680
  %v1683 = vsel %vm74, %v1681, 0
  %1685 = vmatprep.subr.bf16.mxu0 0
  %1686 = vmatpush1.bf16.msra.mxu0 %v303
  %1687 = vmatprep.subr.bf16.mxu0 0
  %1688 = vmatpush1.bf16.msra.mxu0 %v304
  %1689 = vmatprep.subr.bf16.mxu0 0
  %1690 = vmatpush1.bf16.msra.mxu0 0
  %1691 = vmatprep.subr.bf16.mxu0 0
  %1692 = vmatpush1.bf16.msra.mxu0 0
  %1693 = vmatprep.subr.bf16.mxu0 0
  %1694 = vmatpush1.bf16.msra.mxu0 0
  %1695 = vmatprep.subr.bf16.mxu0 0
  %1696 = vmatpush1.bf16.msra.mxu0 0
  %1697 = vmatprep.subr.bf16.mxu0 0
  %1698 = vmatpush1.bf16.msra.mxu0 0
  %1699 = vmatprep.subr.bf16.mxu0 0
  %1700 = vmatpush1.bf16.msra.mxu0 0
  %1701 = vmatprep.subr.bf16.mxu0 0
  %1702 = vmatpush1.bf16.msra.mxu0 0
  %1703 = vmatprep.subr.bf16.mxu0 0
  %1704 = vmatpush1.bf16.msra.mxu0 0
  %1705 = vmatprep.subr.bf16.mxu0 0
  %1706 = vmatpush1.bf16.msra.mxu0 0
  %1707 = vmatprep.subr.bf16.mxu0 0
  %1708 = vmatpush1.bf16.msra.mxu0 0
  %1709 = vmatprep.subr.bf16.mxu0 0
  %1710 = vmatpush1.bf16.msra.mxu0 0
  %1711 = vmatprep.subr.bf16.mxu0 0
  %1712 = vmatpush1.bf16.msra.mxu0 0
  %1713 = vmatprep.subr.bf16.mxu0 0
  %1714 = vmatpush1.bf16.msra.mxu0 0
  %1715 = vmatprep.subr.bf16.mxu0 0
  %1716 = vmatpush1.bf16.msra.mxu0 0
  %1717 = vmatprep.mubr.bf16.mxu0 0
  %1718 = vmatmul.mubr.bf16.gmra.mrb[0].mxu0 %v1683
  %v1719 = vpop.f32.mrb[0].mxu0
  %v1720 = vadd.f32 %v1674, %v1719
  %v1721 = vpop.f32.mrb[0].mxu0
  %v1722 = vpop.f32.mrb[0].mxu0
  %v1723 = vpop.f32.mrb[0].mxu0
  %1724 = vdwg.mxu0
  %v1725 = vadd.f32 %v1720, %v351
  %v1726 = vxor.u32 %v1725, 2147483648
  %v1727 = vmul.f32 %v1726, 1.442695
  %v1728 = vpow.pop %v1727
  %v1729 = vadd.f32 %v1728, 1.0
  %v1730 = vrcp.pop %v1729
  %v1731 = vmul.f32 1.0, %v1730
  %v1732 = vtanh.pop %v1725
  %v1733 = vmul.f32 %v1731, %v1514
  %1735 = vrot.lane.b32.xlu0 %v1732, 64
  %v1736 = vpop.permute.xlu0 %1735
  %v1738 = vmul.f32 %v1731, %v1736
  %1740 = vrot.lane.b32.xlu0 %v1738, 32
  %v1741 = vpop.permute.xlu0 %1740
  %v1743 = vadd.f32 %v1733, %v1741
  %v1744 = vtanh.pop %v1743
  %1746 = vrot.lane.b32.xlu0 %v1744, 64
  %v1747 = vpop.permute.xlu0 %1746
  %v1749 = vmul.f32 %v1731, %v1747
  %v1750 = vadd.f32 %v1521, %v1749
  %v1751 = vpack.c.bf16 %v1749, %v1749
  %1752 = vmatprep.subr.bf16.mxu0 0
  %1753 = vmatpush1.bf16.msra.mxu0 %v127
  %1754 = vmatprep.subr.bf16.mxu0 0
  %1755 = vmatpush1.bf16.msra.mxu0 %v128
  %1756 = vmatprep.subr.bf16.mxu0 0
  %1757 = vmatpush1.bf16.msra.mxu0 0
  %1758 = vmatprep.subr.bf16.mxu0 0
  %1759 = vmatpush1.bf16.msra.mxu0 0
  %1760 = vmatprep.subr.bf16.mxu0 0
  %1761 = vmatpush1.bf16.msra.mxu0 0
  %1762 = vmatprep.subr.bf16.mxu0 0
  %1763 = vmatpush1.bf16.msra.mxu0 0
  %1764 = vmatprep.subr.bf16.mxu0 0
  %1765 = vmatpush1.bf16.msra.mxu0 0
  %1766 = vmatprep.subr.bf16.mxu0 0
  %1767 = vmatpush1.bf16.msra.mxu0 0
  %1768 = vmatprep.subr.bf16.mxu0 0
  %1769 = vmatpush1.bf16.msra.mxu0 0
  %1770 = vmatprep.subr.bf16.mxu0 0
  %1771 = vmatpush1.bf16.msra.mxu0 0
  %1772 = vmatprep.subr.bf16.mxu0 0
  %1773 = vmatpush1.bf16.msra.mxu0 0
  %1774 = vmatprep.subr.bf16.mxu0 0
  %1775 = vmatpush1.bf16.msra.mxu0 0
  %1776 = vmatprep.subr.bf16.mxu0 0
  %1777 = vmatpush1.bf16.msra.mxu0 0
  %1778 = vmatprep.subr.bf16.mxu0 0
  %1779 = vmatpush1.bf16.msra.mxu0 0
  %1780 = vmatprep.subr.bf16.mxu0 0
  %1781 = vmatpush1.bf16.msra.mxu0 0
  %1782 = vmatprep.subr.bf16.mxu0 0
  %1783 = vmatpush1.bf16.msra.mxu0 0
  %1784 = vmatprep.mubr.bf16.mxu0 0
  %1785 = vmatmul.mubr.bf16.gmra.mrb[0].mxu0 %v1637
  %v1786 = vpop.f32.mrb[0].mxu0
  %v1787 = vadd.f32 0.0, %v1786
  %v1788 = vpop.f32.mrb[0].mxu0
  %v1789 = vpop.f32.mrb[0].mxu0
  %v1790 = vpop.f32.mrb[0].mxu0
  %1791 = vdwg.mxu0
  %v1793 = vrot.slane %v1787, 1
  %v1794 = vrot.slane %v1787, 2
  %v1797 = vadd.f32 %v113, %v1793
  %v1798 = vadd.f32 %v116, %v1794
  %v1799 = vxor.u32 %v1797, 2147483648
  %v1800 = vxor.u32 %v1798, 2147483648
  %v1801 = vmul.f32 %v1799, 1.442695
  %v1802 = vpow.pop %v1801
  %v1803 = vmul.f32 %v1800, 1.442695
  %v1804 = vpow.pop %v1803
  %v1805 = vadd.f32 %v1802, 1.0
  %v1806 = vadd.f32 %v1804, 1.0
  %v1807 = vrcp.pop %v1805
  %v1808 = vmul.f32 1.0, %v1807
  %v1809 = vrcp.pop %v1806
  %v1810 = vmul.f32 1.0, %v1809
  %v1811 = vtanh.pop %v1797
  %v1812 = vtanh.pop %v1798
  %v1815 = vrot.slane %v1610, 7
  %v1816 = vrot.slane %v1611, 7
  %v1819 = vmul.f32 %v1808, %v1815
  %v1820 = vmul.f32 %v1810, %v1816
  %1823 = vrot.lane.b32.xlu0 %v1811, 64
  %v1824 = vpop.permute.xlu0 %1823
  %1825 = vrot.lane.b32.xlu0 %v1812, 64
  %v1826 = vpop.permute.xlu0 %1825
  %v1829 = vmul.f32 %v1808, %v1824
  %v1830 = vmul.f32 %v1810, %v1826
  %1833 = vrot.lane.b32.xlu0 %v1829, 32
  %v1834 = vpop.permute.xlu0 %1833
  %1835 = vrot.lane.b32.xlu0 %v1830, 32
  %v1836 = vpop.permute.xlu0 %1835
  %v1839 = vadd.f32 %v1819, %v1834
  %v1840 = vadd.f32 %v1820, %v1836
  %v1841 = vtanh.pop %v1839
  %v1842 = vtanh.pop %v1840
  %1845 = vrot.lane.b32.xlu0 %v1841, 64
  %v1846 = vpop.permute.xlu0 %1845
  %1847 = vrot.lane.b32.xlu0 %v1842, 64
  %v1848 = vpop.permute.xlu0 %1847
  %v1851 = vmul.f32 %v1808, %v1846
  %v1852 = vmul.f32 %v1810, %v1848
  %v1853 = vpack.c.bf16 %v1851, %v1851
  %v1854 = vpack.c.bf16 %v1852, %v1852
  %v1857 = vunpack.c.l.b16 %v1853
  %v1858 = vunpack.c.l.b16 %v1854
  %v1859 = vrot.slane %v1857, 7
  %v1860 = vrot.slane %v1858, 6
  %v1861 = vsel %vm235, %v1860, %v1859
  %v1862 = vpack.c.b16 %v1861, %v1861
  %1863 = vrot.lane.b32.xlu0 %v1862, 32
  %v1864 = vpop.permute.xlu0 %1863
  %v1866 = vsel %vm74, %v1864, 0
  %1868 = vmatprep.subr.bf16.mxu0 0
  %1869 = vmatpush1.bf16.msra.mxu0 %v248
  %1870 = vmatprep.subr.bf16.mxu0 0
  %1871 = vmatpush1.bf16.msra.mxu0 %v249
  %1872 = vmatprep.subr.bf16.mxu0 0
  %1873 = vmatpush1.bf16.msra.mxu0 0
  %1874 = vmatprep.subr.bf16.mxu0 0
  %1875 = vmatpush1.bf16.msra.mxu0 0
  %1876 = vmatprep.subr.bf16.mxu0 0
  %1877 = vmatpush1.bf16.msra.mxu0 0
  %1878 = vmatprep.subr.bf16.mxu0 0
  %1879 = vmatpush1.bf16.msra.mxu0 0
  %1880 = vmatprep.subr.bf16.mxu0 0
  %1881 = vmatpush1.bf16.msra.mxu0 0
  %1882 = vmatprep.subr.bf16.mxu0 0
  %1883 = vmatpush1.bf16.msra.mxu0 0
  %1884 = vmatprep.subr.bf16.mxu0 0
  %1885 = vmatpush1.bf16.msra.mxu0 0
  %1886 = vmatprep.subr.bf16.mxu0 0
  %1887 = vmatpush1.bf16.msra.mxu0 0
  %1888 = vmatprep.subr.bf16.mxu0 0
  %1889 = vmatpush1.bf16.msra.mxu0 0
  %1890 = vmatprep.subr.bf16.mxu0 0
  %1891 = vmatpush1.bf16.msra.mxu0 0
  %1892 = vmatprep.subr.bf16.mxu0 0
  %1893 = vmatpush1.bf16.msra.mxu0 0
  %1894 = vmatprep.subr.bf16.mxu0 0
  %1895 = vmatpush1.bf16.msra.mxu0 0
  %1896 = vmatprep.subr.bf16.mxu0 0
  %1897 = vmatpush1.bf16.msra.mxu0 0
  %1898 = vmatprep.subr.bf16.mxu0 0
  %1899 = vmatpush1.bf16.msra.mxu0 0
  %1900 = vmatprep.mubr.bf16.mxu0 0
  %1901 = vmatmul.mubr.bf16.gmra.mrb[0].mxu0 %v1866
  %v1902 = vpop.f32.mrb[0].mxu0
  %v1903 = vadd.f32 0.0, %v1902
  %v1904 = vpop.f32.mrb[0].mxu0
  %v1905 = vpop.f32.mrb[0].mxu0
  %v1906 = vpop.f32.mrb[0].mxu0
  %1907 = vdwg.mxu0
  %1909 = vrot.lane.b32.xlu0 %v1751, 32
  %v1910 = vpop.permute.xlu0 %1909
  %v1912 = vsel %vm74, %v1910, 0
  %1914 = vmatprep.subr.bf16.mxu0 0
  %1915 = vmatpush1.bf16.msra.mxu0 %v303
  %1916 = vmatprep.subr.bf16.mxu0 0
  %1917 = vmatpush1.bf16.msra.mxu0 %v304
  %1918 = vmatprep.subr.bf16.mxu0 0
  %1919 = vmatpush1.bf16.msra.mxu0 0
  %1920 = vmatprep.subr.bf16.mxu0 0
  %1921 = vmatpush1.bf16.msra.mxu0 0
  %1922 = vmatprep.subr.bf16.mxu0 0
  %1923 = vmatpush1.bf16.msra.mxu0 0
  %1924 = vmatprep.subr.bf16.mxu0 0
  %1925 = vmatpush1.bf16.msra.mxu0 0
  %1926 = vmatprep.subr.bf16.mxu0 0
  %1927 = vmatpush1.bf16.msra.mxu0 0
  %1928 = vmatprep.subr.bf16.mxu0 0
  %1929 = vmatpush1.bf16.msra.mxu0 0
  %1930 = vmatprep.subr.bf16.mxu0 0
  %1931 = vmatpush1.bf16.msra.mxu0 0
  %1932 = vmatprep.subr.bf16.mxu0 0
  %1933 = vmatpush1.bf16.msra.mxu0 0
  %1934 = vmatprep.subr.bf16.mxu0 0
  %1935 = vmatpush1.bf16.msra.mxu0 0
  %1936 = vmatprep.subr.bf16.mxu0 0
  %1937 = vmatpush1.bf16.msra.mxu0 0
  %1938 = vmatprep.subr.bf16.mxu0 0
  %1939 = vmatpush1.bf16.msra.mxu0 0
  %1940 = vmatprep.subr.bf16.mxu0 0
  %1941 = vmatpush1.bf16.msra.mxu0 0
  %1942 = vmatprep.subr.bf16.mxu0 0
  %1943 = vmatpush1.bf16.msra.mxu0 0
  %1944 = vmatprep.subr.bf16.mxu0 0
  %1945 = vmatpush1.bf16.msra.mxu0 0
  %1946 = vmatprep.mubr.bf16.mxu0 0
  %1947 = vmatmul.mubr.bf16.gmra.mrb[0].mxu0 %v1912
  %v1948 = vpop.f32.mrb[0].mxu0
  %v1949 = vadd.f32 %v1903, %v1948
  %v1950 = vpop.f32.mrb[0].mxu0
  %v1951 = vpop.f32.mrb[0].mxu0
  %v1952 = vpop.f32.mrb[0].mxu0
  %1953 = vdwg.mxu0
  %v1954 = vadd.f32 %v1949, %v351
  %v1955 = vxor.u32 %v1954, 2147483648
  %v1956 = vmul.f32 %v1955, 1.442695
  %v1957 = vpow.pop %v1956
  %v1958 = vadd.f32 %v1957, 1.0
  %v1959 = vrcp.pop %v1958
  %v1960 = vmul.f32 1.0, %v1959
  %v1961 = vtanh.pop %v1954
  %v1962 = vmul.f32 %v1960, %v1743
  %1964 = vrot.lane.b32.xlu0 %v1961, 64
  %v1965 = vpop.permute.xlu0 %1964
  %v1967 = vmul.f32 %v1960, %v1965
  %1969 = vrot.lane.b32.xlu0 %v1967, 32
  %v1970 = vpop.permute.xlu0 %1969
  %v1972 = vadd.f32 %v1962, %v1970
  %v1973 = vtanh.pop %v1972
  %1975 = vrot.lane.b32.xlu0 %v1973, 64
  %v1976 = vpop.permute.xlu0 %1975
  %v1978 = vmul.f32 %v1960, %v1976
  %v1979 = vadd.f32 %v1750, %v1978
  %v1982 = vunpack.c.l.s4 1966171168
  %v1983 = vunpack.c.0.s8 %v1982
  %v1984 = vlaneseq
  %v1985 = vshrl.u32 %v1984, 7
  %v1986 = vsub.s32 %v1983, %v1985
  %v1987 = vrot.slane %v377, %v1986
  %v1988 = vcombine.high %v1987, %v1987
  %v1990 = vunpack.c.l.s4 1966171168
  %v1991 = vunpack.c.0.s8 %v1990
  %v1992 = vlaneseq
  %v1993 = vshrl.u32 %v1992, 7
  %v1994 = vsub.s32 %v1991, %v1993
  %v1995 = vrot.slane %v1987, %v1994
  %v1997 = vunpack.c.l.s4 1966171168
  %v1998 = vunpack.c.0.s8 %v1997
  %v1999 = vlaneseq
  %v2000 = vshrl.u32 %v1999, 7
  %v2001 = vsub.s32 %v1998, %v2000
  %v2002 = vrot.slane %v1988, %v2001
  %v2007 = vunpack.c.l.s4 1966171168
  %v2008 = vunpack.c.0.s8 %v2007
  %v2009 = vlaneseq
  %v2010 = vshrl.u32 %v2009, 7
  %v2011 = vsub.s32 %v2008, %v2010
  %v2012 = vrot.slane %v604, %v2011
  %v2013 = vcombine.high %v2012, %v2012
  %v2015 = vunpack.c.l.s4 1966171168
  %v2016 = vunpack.c.0.s8 %v2015
  %v2017 = vlaneseq
  %v2018 = vshrl.u32 %v2017, 7
  %v2019 = vsub.s32 %v2016, %v2018
  %v2020 = vrot.slane %v2012, %v2019
  %v2022 = vunpack.c.l.s4 1966171168
  %v2023 = vunpack.c.0.s8 %v2022
  %v2024 = vlaneseq
  %v2025 = vshrl.u32 %v2024, 7
  %v2026 = vsub.s32 %v2023, %v2025
  %v2027 = vrot.slane %v2013, %v2026
  %v2030 = vunpack.c.l.s4 1966171168
  %v2031 = vunpack.c.0.s8 %v2030
  %v2032 = vlaneseq
  %v2033 = vshrl.u32 %v2032, 7
  %v2034 = vsub.s32 %v2031, %v2033
  %v2035 = vrot.slane %v833, %v2034
  %v2036 = vcombine.high %v2035, %v2035
  %v2038 = vunpack.c.l.s4 1966171168
  %v2039 = vunpack.c.0.s8 %v2038
  %v2040 = vlaneseq
  %v2041 = vshrl.u32 %v2040, 7
  %v2042 = vsub.s32 %v2039, %v2041
  %v2043 = vrot.slane %v2035, %v2042
  %v2045 = vunpack.c.l.s4 1966171168
  %v2046 = vunpack.c.0.s8 %v2045
  %v2047 = vlaneseq
  %v2048 = vshrl.u32 %v2047, 7
  %v2049 = vsub.s32 %v2046, %v2048
  %v2050 = vrot.slane %v2036, %v2049
  %v2053 = vunpack.c.l.s4 1966171168
  %v2054 = vunpack.c.0.s8 %v2053
  %v2055 = vlaneseq
  %v2056 = vshrl.u32 %v2055, 7
  %v2057 = vsub.s32 %v2054, %v2056
  %v2058 = vrot.slane %v1062, %v2057
  %v2059 = vcombine.high %v2058, %v2058
  %v2061 = vunpack.c.l.s4 1966171168
  %v2062 = vunpack.c.0.s8 %v2061
  %v2063 = vlaneseq
  %v2064 = vshrl.u32 %v2063, 7
  %v2065 = vsub.s32 %v2062, %v2064
  %v2066 = vrot.slane %v2058, %v2065
  %v2068 = vunpack.c.l.s4 1966171168
  %v2069 = vunpack.c.0.s8 %v2068
  %v2070 = vlaneseq
  %v2071 = vshrl.u32 %v2070, 7
  %v2072 = vsub.s32 %v2069, %v2071
  %v2073 = vrot.slane %v2059, %v2072
  %v2076 = vunpack.c.l.s4 1966171168
  %v2077 = vunpack.c.0.s8 %v2076
  %v2078 = vlaneseq
  %v2079 = vshrl.u32 %v2078, 7
  %v2080 = vsub.s32 %v2077, %v2079
  %v2081 = vrot.slane %v1291, %v2080
  %v2082 = vcombine.high %v2081, %v2081
  %v2084 = vunpack.c.l.s4 1966171168
  %v2085 = vunpack.c.0.s8 %v2084
  %v2086 = vlaneseq
  %v2087 = vshrl.u32 %v2086, 7
  %v2088 = vsub.s32 %v2085, %v2087
  %v2089 = vrot.slane %v2081, %v2088
  %v2091 = vunpack.c.l.s4 1966171168
  %v2092 = vunpack.c.0.s8 %v2091
  %v2093 = vlaneseq
  %v2094 = vshrl.u32 %v2093, 7
  %v2095 = vsub.s32 %v2092, %v2094
  %v2096 = vrot.slane %v2082, %v2095
  %v2099 = vunpack.c.l.s4 1966171168
  %v2100 = vunpack.c.0.s8 %v2099
  %v2101 = vlaneseq
  %v2102 = vshrl.u32 %v2101, 7
  %v2103 = vsub.s32 %v2100, %v2102
  %v2104 = vrot.slane %v1520, %v2103
  %v2105 = vcombine.high %v2104, %v2104
  %v2107 = vunpack.c.l.s4 1966171168
  %v2108 = vunpack.c.0.s8 %v2107
  %v2109 = vlaneseq
  %v2110 = vshrl.u32 %v2109, 7
  %v2111 = vsub.s32 %v2108, %v2110
  %v2112 = vrot.slane %v2104, %v2111
  %v2114 = vunpack.c.l.s4 1966171168
  %v2115 = vunpack.c.0.s8 %v2114
  %v2116 = vlaneseq
  %v2117 = vshrl.u32 %v2116, 7
  %v2118 = vsub.s32 %v2115, %v2117
  %v2119 = vrot.slane %v2105, %v2118
  %v2122 = vunpack.c.l.s4 1966171168
  %v2123 = vunpack.c.0.s8 %v2122
  %v2124 = vlaneseq
  %v2125 = vshrl.u32 %v2124, 7
  %v2126 = vsub.s32 %v2123, %v2125
  %v2127 = vrot.slane %v1749, %v2126
  %v2128 = vcombine.high %v2127, %v2127
  %v2130 = vunpack.c.l.s4 1966171168
  %v2131 = vunpack.c.0.s8 %v2130
  %v2132 = vlaneseq
  %v2133 = vshrl.u32 %v2132, 7
  %v2134 = vsub.s32 %v2131, %v2133
  %v2135 = vrot.slane %v2127, %v2134
  %v2137 = vunpack.c.l.s4 1966171168
  %v2138 = vunpack.c.0.s8 %v2137
  %v2139 = vlaneseq
  %v2140 = vshrl.u32 %v2139, 7
  %v2141 = vsub.s32 %v2138, %v2140
  %v2142 = vrot.slane %v2128, %v2141
  %v2145 = vunpack.c.l.s4 1966171168
  %v2146 = vunpack.c.0.s8 %v2145
  %v2147 = vlaneseq
  %v2148 = vshrl.u32 %v2147, 7
  %v2149 = vsub.s32 %v2146, %v2148
  %v2150 = vrot.slane %v1978, %v2149
  %v2151 = vcombine.high %v2150, %v2150
  %v2153 = vunpack.c.l.s4 1966171168
  %v2154 = vunpack.c.0.s8 %v2153
  %v2155 = vlaneseq
  %v2156 = vshrl.u32 %v2155, 7
  %v2157 = vsub.s32 %v2154, %v2156
  %v2158 = vrot.slane %v2150, %v2157
  %v2160 = vunpack.c.l.s4 1966171168
  %v2161 = vunpack.c.0.s8 %v2160
  %v2162 = vlaneseq
  %v2163 = vshrl.u32 %v2162, 7
  %v2164 = vsub.s32 %v2161, %v2163
  %v2165 = vrot.slane %v2151, %v2164
  %v2166 = vlaneseq
  %v2167 = vshrl.u32 %v2166, 7
  %v2168 = vsub.s32 0, %v2167
  %v2169 = vrot.slane %v2020, %v2168
  %v2170 = vlaneseq
  %v2171 = vshrl.u32 %v2170, 7
  %v2172 = vsub.s32 0, %v2171
  %v2173 = vrot.slane %v2027, %v2172
  %v2176 = vlaneseq
  %v2177 = vshrl.u32 %v2176, 7
  %v2178 = vsub.s32 0, %v2177
  %v2179 = vrot.slane %v2043, %v2178
  %v2180 = vlaneseq
  %v2181 = vshrl.u32 %v2180, 7
  %v2182 = vsub.s32 0, %v2181
  %v2183 = vrot.slane %v2050, %v2182
  %v2186 = vlaneseq
  %v2187 = vshrl.u32 %v2186, 7
  %v2188 = vsub.s32 0, %v2187
  %v2189 = vrot.slane %v2066, %v2188
  %v2190 = vlaneseq
  %v2191 = vshrl.u32 %v2190, 7
  %v2192 = vsub.s32 0, %v2191
  %v2193 = vrot.slane %v2073, %v2192
  %v2196 = vlaneseq
  %v2197 = vshrl.u32 %v2196, 7
  %v2198 = vsub.s32 0, %v2197
  %v2199 = vrot.slane %v2089, %v2198
  %v2200 = vlaneseq
  %v2201 = vshrl.u32 %v2200, 7
  %v2202 = vsub.s32 0, %v2201
  %v2203 = vrot.slane %v2096, %v2202
  %v2206 = vlaneseq
  %v2207 = vshrl.u32 %v2206, 7
  %v2208 = vsub.s32 0, %v2207
  %v2209 = vrot.slane %v2112, %v2208
  %v2210 = vlaneseq
  %v2211 = vshrl.u32 %v2210, 7
  %v2212 = vsub.s32 0, %v2211
  %v2213 = vrot.slane %v2119, %v2212
  %v2216 = vlaneseq
  %v2217 = vshrl.u32 %v2216, 7
  %v2218 = vsub.s32 0, %v2217
  %v2219 = vrot.slane %v2135, %v2218
  %v2220 = vlaneseq
  %v2221 = vshrl.u32 %v2220, 7
  %v2222 = vsub.s32 0, %v2221
  %v2223 = vrot.slane %v2142, %v2222
  %v2226 = vlaneseq
  %v2227 = vshrl.u32 %v2226, 7
  %v2228 = vsub.s32 0, %v2227
  %v2229 = vrot.slane %v2158, %v2228
  %v2230 = vlaneseq
  %v2231 = vshrl.u32 %v2230, 7
  %v2232 = vsub.s32 0, %v2231
  %v2233 = vrot.slane %v2165, %v2232
  %vm2236 = vcmask 1040384
  %v2237 = vsel %vm2236, %v1995, %v2169
  %v2238 = vsel %vm2236, %v2002, %v2173
  %vm2239 = vcmask 1041408
  %v2240 = vsel %vm2239, %v2237, %v2179
  %v2241 = vsel %vm2239, %v2238, %v2183
  %vm2242 = vcmask 1042432
  %v2243 = vsel %vm2242, %v2240, %v2189
  %v2244 = vsel %vm2242, %v2241, %v2193
  %vm2245 = vcmask 1043456
  %v2246 = vsel %vm2245, %v2243, %v2199
  %v2247 = vsel %vm2245, %v2244, %v2203
  %vm2248 = vcmask 1044480
  %v2249 = vsel %vm2248, %v2246, %v2209
  %v2250 = vsel %vm2248, %v2247, %v2213
  %vm2251 = vcmask 1045504
  %v2252 = vsel %vm2251, %v2249, %v2219
  %v2253 = vsel %vm2251, %v2250, %v2223
  %vm2254 = vcmask 1046528
  %v2255 = vsel %vm2254, %v2252, %v2229
  %v2256 = vsel %vm2254, %v2253, %v2233
  %v2257 = vpack.c.bf16 %v2255, %v2255
  %v2258 = vpack.c.bf16 %v2256, %v2256
  %v2261 = vunpack.c.l.b16 %v2257
  %v2262 = vunpack.c.l.b16 %v2258
  %v2263 = vpack.c.b16 %v2261, %v2261
  %v2264 = vpack.c.b16 %v2262, %v2262
  %2265 = vrot.lane.b32.xlu0 %v2263, 32
  %v2266 = vpop.permute.xlu0 %2265
  %2267 = vrot.lane.b32.xlu0 %v2264, 32
  %v2268 = vpop.permute.xlu0 %2267
  %vm2271 = vcmask 257024
  %2272 = vst.msk [vmem:[%s9] sm:$0xf] %vm2271, %v2266
  %2273 = vst.msk [vmem:[%s9 + $0x4] sm:$0xf] %vm2271, %v2268
  %v2274 = vmul.f32 %v1979, 0.125
  %v2275 = vld [vmem:[%s7] sm:$0xff]
  %v2276 = vld [vmem:[%s7 + $0x8] sm:$0xff]
  %v2277 = vld [vmem:[%s7 + $0x10] sm:$0xff]
  %v2278 = vld [vmem:[%s7 + $0x18] sm:$0xff]
  %v2279 = vld [vmem:[%s8] sm:$0x1]
  %v2281 = vlaneseq
  %v2282 = vshrl.u32 %v2281, 7
  %v2283 = vsub.s32 0, %v2282
  %v2284 = vrot.slane %v2279, %v2283
  %2287 = vrot.lane.b32.xlu0 %v2274, 32
  %v2288 = vpop.permute.xlu0 %2287
  %v2289 = vsel %vm74, %v2288, 0
  %2291 = vmatprep.subr.mxu0 0.0
  %2292 = vmatpush1.msra.mxu0 %v2275
  %2293 = vmatprep.subr.mxu0 0.0
  %2294 = vmatpush1.msra.mxu0 %v2276
  %2295 = vmatprep.subr.mxu0 0.0
  %2296 = vmatpush1.msra.mxu0 %v2277
  %2297 = vmatprep.subr.mxu0 0.0
  %2298 = vmatpush1.msra.mxu0 %v2278
  %2299 = vmatprep.subr.mxu0 0.0
  %2300 = vmatpush1.msra.mxu0 0.0
  %2301 = vmatprep.subr.mxu0 0.0
  %2302 = vmatpush1.msra.mxu0 0.0
  %2303 = vmatprep.subr.mxu0 0.0
  %2304 = vmatpush1.msra.mxu0 0.0
  %2305 = vmatprep.subr.mxu0 0.0
  %2306 = vmatpush1.msra.mxu0 0.0
  %2307 = vmatprep.subr.mxu0 0.0
  %2308 = vmatpush1.msra.mxu0 0.0
  %2309 = vmatprep.subr.mxu0 0.0
  %2310 = vmatpush1.msra.mxu0 0.0
  %2311 = vmatprep.subr.mxu0 0.0
  %2312 = vmatpush1.msra.mxu0 0.0
  %2313 = vmatprep.subr.mxu0 0.0
  %2314 = vmatpush1.msra.mxu0 0.0
  %2315 = vmatprep.subr.mxu0 0.0
  %2316 = vmatpush1.msra.mxu0 0.0
  %2317 = vmatprep.subr.mxu0 0.0
  %2318 = vmatpush1.msra.mxu0 0.0
  %2319 = vmatprep.subr.mxu0 0.0
  %2320 = vmatpush1.msra.mxu0 0.0
  %2321 = vmatprep.subr.mxu0 0.0
  %2322 = vmatpush1.msra.mxu0 0.0
  %2323 = vmatprep.subr.mxu0 0.0
  %2324 = vmatpush1.msra.mxu0 0.0
  %2325 = vmatprep.subr.mxu0 0.0
  %2326 = vmatpush1.msra.mxu0 0.0
  %2327 = vmatprep.subr.mxu0 0.0
  %2328 = vmatpush1.msra.mxu0 0.0
  %2329 = vmatprep.subr.mxu0 0.0
  %2330 = vmatpush1.msra.mxu0 0.0
  %2331 = vmatprep.subr.mxu0 0.0
  %2332 = vmatpush1.msra.mxu0 0.0
  %2333 = vmatprep.subr.mxu0 0.0
  %2334 = vmatpush1.msra.mxu0 0.0
  %2335 = vmatprep.subr.mxu0 0.0
  %2336 = vmatpush1.msra.mxu0 0.0
  %2337 = vmatprep.subr.mxu0 0.0
  %2338 = vmatpush1.msra.mxu0 0.0
  %2339 = vmatprep.subr.mxu0 0.0
  %2340 = vmatpush1.msra.mxu0 0.0
  %2341 = vmatprep.subr.mxu0 0.0
  %2342 = vmatpush1.msra.mxu0 0.0
  %2343 = vmatprep.subr.mxu0 0.0
  %2344 = vmatpush1.msra.mxu0 0.0
  %2345 = vmatprep.subr.mxu0 0.0
  %2346 = vmatpush1.msra.mxu0 0.0
  %2347 = vmatprep.subr.mxu0 0.0
  %2348 = vmatpush1.msra.mxu0 0.0
  %2349 = vmatprep.subr.mxu0 0.0
  %2350 = vmatpush1.msra.mxu0 0.0
  %2351 = vmatprep.subr.mxu0 0.0
  %2352 = vmatpush1.msra.mxu0 0.0
  %2353 = vmatprep.subr.mxu0 0.0
  %2354 = vmatpush1.msra.mxu0 0.0
  %2355 = vmatprep.mubr.f32.mxu0 0.0
  %2356 = vmatmul.mubr.f32.gmra.mrb[0].mxu0 %v2289
  %v2357 = vpop.f32.mrb[0].mxu0
  %v2358 = vadd.f32 %v2284, %v2357
  %v2359 = vpop.f32.mrb[0].mxu0
  %2360 = vdwg.mxu0
  %2361 = vst [vmem:[%s10] sm:$0x3] %v2358
  // Predicated region
  $region38: #{simple_lm_forward.2} parent=0 // pred_check
    _
  $region39: #{simple_lm_forward.2} parent=0 // pred_check_branch
    %2363 = sbr.rel (0) target = $region41
  $region40: #{simple_lm_forward.2} parent=0 // pred_region
    _
  $region41: #{simple_lm_forward.2} parent=0 // pred_fallthru
    _
  // Predicated region
  $region42: #{simple_lm_forward.2} parent=0 // pred_check
    _
  $region43: #{simple_lm_forward.2} parent=0 // pred_check_branch
    %2365 = sbr.rel (0) target = $region45
  $region44: #{simple_lm_forward.2} parent=0 // pred_region
    _
  $region45: #{simple_lm_forward.2} parent=0 // pred_fallthru
    _
  // Predicated region
  $region46: #{simple_lm_forward.2} parent=0 // pred_check
    _
  $region47: #{simple_lm_forward.2} parent=0 // pred_check_branch
    %2367 = sbr.rel (0) target = $region49
  $region48: #{simple_lm_forward.2} parent=0 // pred_region
    _
  $region49: #{simple_lm_forward.2} parent=0 // pred_fallthru
    _
  // Predicated region
  $region50: #{simple_lm_forward.2} parent=0 // pred_check
    _
  $region51: #{simple_lm_forward.2} parent=0 // pred_check_branch
    %2369 = sbr.rel (0) target = $region53
  $region52: #{simple_lm_forward.2} parent=0 // pred_region
    _
  $region53: #{simple_lm_forward.2} parent=0 // pred_fallthru
    _

</llo_original>
